<compile_context>
chip_gen: v7x
topology: tpu7x:2x2x1
jax: 0.10.0
libtpu: 0.0.40
codegen_flags: <defaults>
</compile_context>

<pallas_src>
import jax
import jax.numpy as jnp
from jax import lax
from jax.experimental import pallas as pl
from jax.experimental.pallas import tpu as pltpu

NORM_GROUPS = 32                                   # nn.GroupNorm(num_groups=32)
SHUFFLE_GROUPS = 4                                 # ChannelShuffle(groups=4)
GROUPS_PER_STEP = NORM_GROUPS // SHUFFLE_GROUPS    # 8 grid steps per batch elem
EPS = 1e-5                                         # PyTorch GroupNorm default


def _sum11(v):
    # (T, S) -> (1, 1): lane reduce first, then sublane reduce.
    return jnp.sum(jnp.sum(v, axis=1, keepdims=True), axis=0, keepdims=True)


def _tsb_kernel(x_ref, p_ref, o_ref):
    # x_ref: (4, cg, T, S)  input dtype; one norm group from each shuffle group
    # p_ref: (6, C) float32 in SMEM; rows = [tap0, tap1, tap2, bias, gamma, beta]
    # o_ref: (4*cg, T, S)   output dtype (contiguous, already-shuffled slab)
    _sg, cg, t, s = x_ref.shape
    cpg = cg * GROUPS_PER_STEP                     # channels per shuffle group
    j = pl.program_id(1)                           # norm group within shuffle group
    inv_n = 1.0 / (cg * t * s)

    # Temporal-halo masks: zero the wrapped-around frame of each rolled copy.
    t_idx = lax.broadcasted_iota(jnp.int32, (t, s), 0)
    m_prev = (t_idx > 0).astype(jnp.float32)       # kills x[-1] at frame 0
    m_next = (t_idx < t - 1).astype(jnp.float32)   # kills x[T]  at frame T-1

    def conv_channel(g, k):
        """3-tap depthwise temporal conv of input channel (g, j*cg + k), f32."""
        xc = x_ref[g, k].astype(jnp.float32)                     # (T, S)
        x_prev = pltpu.roll(xc, shift=1, axis=0) * m_prev        # x[tau-1]
        x_next = pltpu.roll(xc, shift=t - 1, axis=0) * m_next    # x[tau+1]
        ch = g * cpg + j * cg + k                                # original channel
        return (p_ref[0, ch] * x_prev + p_ref[1, ch] * xc
                + p_ref[2, ch] * x_next + p_ref[3, ch])

    unroll = min(cg, 4)

    for g in range(SHUFFLE_GROUPS):                # 4 complete GroupNorm groups
        # Pass 1: single-pass f32 sum / sum-of-squares over the group's
        # cg * T * S conv outputs; conv recomputed instead of stored.
        def stats_body(k, carry):
            s1, s2 = carry
            cv = conv_channel(g, k)
            return s1 + _sum11(cv), s2 + _sum11(cv * cv)

        zero = jnp.zeros((1, 1), jnp.float32)
        s1, s2 = lax.fori_loop(0, cg, stats_body, (zero, zero), unroll=unroll)
        mean = s1 * inv_n
        # TODO(synk): single-pass E[x^2]-mean^2 can lose precision when the conv
        # output mean dominates its spread; switch to a Welford pass if needed.
        var = jnp.maximum(s2 * inv_n - mean * mean, 0.0)
        rstd = lax.rsqrt(var + EPS)

        # Pass 2: recompute conv, normalize + affine + ReLU, store each channel
        # directly at its shuffled destination row (k*4 + g) of the slab.
        def out_body(k, carry):
            cv = conv_channel(g, k)
            ch = g * cpg + j * cg + k
            scale = rstd * p_ref[4, ch]
            shift = p_ref[5, ch] - mean * scale
            y = jnp.maximum(cv * scale + shift, 0.0)
            o_ref[k * SHUFFLE_GROUPS + g] = y.astype(o_ref.dtype)
            return carry

        lax.fori_loop(0, cg, out_body, jnp.int32(0), unroll=unroll)


def temporal_shuffle_block(x, conv_w, conv_b, gn_w, gn_b, *, temporal_stride=1):
    """Forward of TemporalShuffleBlock.

    x:      (b, c, t, h, w)  any float dtype (preserved in the output)
    conv_w: (c, 1, 3, 1, 1)  depthwise Conv3d weight (PyTorch layout)
    conv_b: (c,)             Conv3d bias
    gn_w:   (c,)             GroupNorm weight (gamma)
    gn_b:   (c,)             GroupNorm bias (beta)
    """
    if temporal_stride != 1:
        # TODO(synk): temporal_stride > 1 (strided 3-tap conv) not implemented;
        # the module default is stride 1.
        raise NotImplementedError("temporal_stride != 1 is not supported")

    b, c, t, h, w = x.shape
    assert c % NORM_GROUPS == 0, "GroupNorm(32) requires channels % 32 == 0"
    assert c % SHUFFLE_GROUPS == 0, "ChannelShuffle(4) requires channels % 4 == 0"
    cg = c // NORM_GROUPS                      # channels per norm group
    cpg = c // SHUFFLE_GROUPS                  # channels per shuffle group
    s = h * w                                  # lane axis
    # NOTE: if h*w is not a multiple of 128 for a real workload, pad S in the
    # wrapper and mask it out of the GroupNorm sums for lane-dense stores.

    # Free metadata reshape: channels split into (shuffle_group, cpg), spatial
    # flattened onto the lane axis.  No jnp.pad - the halo is handled in-kernel.
    x_view = x.reshape(b, SHUFFLE_GROUPS, cpg, t, s)

    # Per-channel scalar table for SMEM:
    # rows = [tap0, tap1, tap2, conv_bias, gamma, beta], columns = channel.
    taps = jnp.asarray(conv_w, jnp.float32).reshape(c, 3)
    params = jnp.stack(
        [taps[:, 0], taps[:, 1], taps[:, 2],
         jnp.asarray(conv_b, jnp.float32),
         jnp.asarray(gn_w, jnp.float32),
         jnp.asarray(gn_b, jnp.float32)], axis=0)              # (6, c) f32

    # VMEM budget: double-buffered in+out blocks + slack; keep headroom below
    # the device's physical VMEM (important on v7x's 64 MiB per TensorCore).
    itemsize = jnp.dtype(x.dtype).itemsize
    blk_elems = SHUFFLE_GROUPS * cg * t * s
    in_bytes = blk_elems * itemsize
    out_bytes = blk_elems * itemsize
    try:
        vmem_cap = int(pltpu.get_tpu_info().vmem_capacity_bytes)
    except Exception:
        vmem_cap = 64 << 20                    # conservative fallback (v7x)
    vmem_limit = int(min(max(2 * (in_bytes + out_bytes) + (4 << 20), 16 << 20),
                         vmem_cap - (16 << 20)))

    out = pl.pallas_call(
        _tsb_kernel,
        out_shape=jax.ShapeDtypeStruct((b, c, t, s), x.dtype),
        grid_spec=pltpu.PrefetchScalarGridSpec(
            num_scalar_prefetch=0,
            grid=(b, GROUPS_PER_STEP),
            in_specs=[
                # One norm group (cg channels) from each of the 4 shuffle groups.
                pl.BlockSpec((pl.Squeezed(), SHUFFLE_GROUPS, cg, t, s),
                             lambda i, j: (i, 0, j, 0, 0)),
                # Small per-channel scalar table, resident in SMEM.
                pl.BlockSpec(memory_space=pltpu.MemorySpace.SMEM),
            ],
            # The shuffled output of step (i, j) is a contiguous channel slab.
            out_specs=pl.BlockSpec((pl.Squeezed(), SHUFFLE_GROUPS * cg, t, s),
                                   lambda i, j: (i, j, 0, 0)),
        ),
        compiler_params=pltpu.CompilerParams(
            dimension_semantics=("parallel", "parallel"),
            vmem_limit_bytes=vmem_limit,
        ),
    )(x_view, params)

    return out.reshape(b, c, t, h, w)


def temporal_shuffle_block_ref(x, conv_w, conv_b, gn_w, gn_b):
    """Pure-JAX reference matching the PyTorch forward."""
    b, c, t, h, w = x.shape
    xf = x.astype(jnp.float32)
    taps = jnp.asarray(conv_w, jnp.float32).reshape(c, 3)
    xp = jnp.pad(xf, ((0, 0), (0, 0), (1, 1), (0, 0), (0, 0)))
    conv = (taps[:, 0].reshape(1, c, 1, 1, 1) * xp[:, :, 0:t]
            + taps[:, 1].reshape(1, c, 1, 1, 1) * xp[:, :, 1:t + 1]
            + taps[:, 2].reshape(1, c, 1, 1, 1) * xp[:, :, 2:t + 2]
            + jnp.asarray(conv_b, jnp.float32).reshape(1, c, 1, 1, 1))
    # GroupNorm(32)
    g = conv.reshape(b, NORM_GROUPS, c // NORM_GROUPS, t, h, w)
    mean = g.mean(axis=(2, 3, 4, 5), keepdims=True)
    var = g.var(axis=(2, 3, 4, 5), keepdims=True)
    gn = ((g - mean) / jnp.sqrt(var + EPS)).reshape(b, c, t, h, w)
    gn = (gn * jnp.asarray(gn_w, jnp.float32).reshape(1, c, 1, 1, 1)
          + jnp.asarray(gn_b, jnp.float32).reshape(1, c, 1, 1, 1))
    y = jnp.maximum(gn, 0.0)
    # ChannelShuffle(4)
    y = y.reshape(b, SHUFFLE_GROUPS, c // SHUFFLE_GROUPS, t, h, w)
    y = jnp.swapaxes(y, 1, 2).reshape(b, c, t, h, w)
    return y.astype(x.dtype)


if __name__ == "__main__":
    # Small shapes consistent with the module: GroupNorm(32) forces C % 32 == 0.
    B, C, T, H, W = 2, 64, 8, 16, 16      # S = H*W = 256 (lane-dense)

    key = jax.random.PRNGKey(0)
    kx, kw, kb, kg, kbt = jax.random.split(key, 5)
    x = jax.random.normal(kx, (B, C, T, H, W), dtype=jnp.float32)
    conv_w = 0.3 * jax.random.normal(kw, (C, 1, 3, 1, 1), dtype=jnp.float32)
    conv_b = 0.1 * jax.random.normal(kb, (C,), dtype=jnp.float32)
    gn_w = 1.0 + 0.1 * jax.random.normal(kg, (C,), dtype=jnp.float32)
    gn_b = 0.1 * jax.random.normal(kbt, (C,), dtype=jnp.float32)

    out = temporal_shuffle_block(x, conv_w, conv_b, gn_w, gn_b)
    out = jax.block_until_ready(out)

    ref = temporal_shuffle_block_ref(x, conv_w, conv_b, gn_w, gn_b)
    assert out.shape == (B, C, T, H, W)
    max_err = float(jnp.max(jnp.abs(out - ref)))
    assert jnp.allclose(out, ref, atol=1e-4, rtol=1e-4), f"mismatch: {max_err}"

    print("KERNEL_OK")
</pallas_src>

<mosaic_0001>
module attributes {stable_mosaic.version = 11 : i64} {
  func.func @_tsb_kernel(%arg0: i32, %arg1: i32, %arg2: memref<1x4x2x8x256xf32, #tpu.memory_space<vmem>>, %arg3: memref<6x64xf32, #tpu.memory_space<smem>>, %arg4: memref<1x8x8x256xf32, #tpu.memory_space<vmem>>) attributes {dimension_semantics = [#tpu.dimension_semantics<parallel>, #tpu.dimension_semantics<parallel>], iteration_bounds = array<i64: 2, 8>, scalar_prefetch = 0 : i64, scratch_operands = 0 : i64, tpu.core_type = #tpu.core_type<tc>, window_params = [{transform_indices = @transform_0, window_bounds = array<i64: 1, 4, 2, 8, 256>}, {transform_indices = @transform_1, window_bounds = array<i64: 6, 64>}, {transform_indices = @transform_2, window_bounds = array<i64: 1, 8, 8, 256>}]} {
    %0 = tpu.iota {dimensions = array<i32: 0>} : vector<8x256xi32>
    %c0_i32 = arith.constant 0 : i32
    %1 = vector.broadcast %c0_i32 : i32 to vector<8x256xi32>
    %2 = arith.cmpi sgt, %0, %1 : vector<8x256xi32>
    %3 = arith.extui %2 : vector<8x256xi1> to vector<8x256xi32>
    %4 = arith.sitofp %3 : vector<8x256xi32> to vector<8x256xf32>
    %c7_i32 = arith.constant 7 : i32
    %5 = vector.broadcast %c7_i32 : i32 to vector<8x256xi32>
    %6 = arith.cmpi slt, %0, %5 : vector<8x256xi32>
    %7 = arith.extui %6 : vector<8x256xi1> to vector<8x256xi32>
    %8 = arith.sitofp %7 : vector<8x256xi32> to vector<8x256xf32>
    %cst = arith.constant 0.000000e+00 : f32
    %9 = vector.broadcast %cst : f32 to vector<1x1xf32>
    %c0_i32_0 = arith.constant 0 : i32
    %c0 = arith.constant 0 : index
    %c0_1 = arith.constant 0 : index
    %10 = arith.index_cast %c0_i32_0 : i32 to index
    %c0_2 = arith.constant 0 : index
    %c0_3 = arith.constant 0 : index
    %11 = vector.load %arg2[%c0, %c0_1, %10, %c0_2, %c0_3] : memref<1x4x2x8x256xf32, #tpu.memory_space<vmem>>, vector<1x1x1x8x256xf32>
    %12 = vector.shape_cast %11 : vector<1x1x1x8x256xf32> to vector<8x256xf32>
    %c1_i32 = arith.constant 1 : i32
    %13 = tpu.dynamic_rotate %12 by %c1_i32 dim 0 : vector<8x256xf32>, i32 -> vector<8x256xf32>
    %14 = arith.mulf %13, %4 : vector<8x256xf32>
    %c7_i32_4 = arith.constant 7 : i32
    %15 = tpu.dynamic_rotate %12 by %c7_i32_4 dim 0 : vector<8x256xf32>, i32 -> vector<8x256xf32>
    %16 = arith.mulf %15, %8 : vector<8x256xf32>
    %c2_i32 = arith.constant 2 : i32
    %17 = arith.muli %arg1, %c2_i32 : i32
    %c0_i32_5 = arith.constant 0 : i32
    %18 = arith.addi %c0_i32_5, %17 : i32
    %19 = arith.addi %18, %c0_i32_0 : i32
    %c0_6 = arith.constant 0 : index
    %20 = arith.index_cast %19 : i32 to index
    %21 = memref.load %arg3[%c0_6, %20] : memref<6x64xf32, #tpu.memory_space<smem>>
    %22 = vector.broadcast %21 : f32 to vector<8x256xf32>
    %23 = arith.mulf %22, %14 : vector<8x256xf32>
    %c1 = arith.constant 1 : index
    %24 = arith.index_cast %19 : i32 to index
    %25 = memref.load %arg3[%c1, %24] : memref<6x64xf32, #tpu.memory_space<smem>>
    %26 = vector.broadcast %25 : f32 to vector<8x256xf32>
    %27 = arith.mulf %26, %12 : vector<8x256xf32>
    %28 = arith.addf %23, %27 : vector<8x256xf32>
    %c2 = arith.constant 2 : index
    %29 = arith.index_cast %19 : i32 to index
    %30 = memref.load %arg3[%c2, %29] : memref<6x64xf32, #tpu.memory_space<smem>>
    %31 = vector.broadcast %30 : f32 to vector<8x256xf32>
    %32 = arith.mulf %31, %16 : vector<8x256xf32>
    %33 = arith.addf %28, %32 : vector<8x256xf32>
    %c3 = arith.constant 3 : index
    %34 = arith.index_cast %19 : i32 to index
    %35 = memref.load %arg3[%c3, %34] : memref<6x64xf32, #tpu.memory_space<smem>>
    %36 = vector.broadcast %35 : f32 to vector<8x256xf32>
    %37 = arith.addf %33, %36 : vector<8x256xf32>
    %cst_7 = arith.constant dense<0.000000e+00> : vector<8xf32>
    %38 = vector.multi_reduction <add>, %37, %cst_7 [1] : vector<8x256xf32> to vector<8xf32>
    %39 = vector.shape_cast %38 : vector<8xf32> to vector<8x1xf32>
    %cst_8 = arith.constant dense<0.000000e+00> : vector<1xf32>
    %40 = vector.multi_reduction <add>, %39, %cst_8 [0] : vector<8x1xf32> to vector<1xf32>
    %41 = vector.shape_cast %40 : vector<1xf32> to vector<1x1xf32>
    %42 = arith.addf %9, %41 : vector<1x1xf32>
    %43 = arith.mulf %37, %37 : vector<8x256xf32>
    %cst_9 = arith.constant dense<0.000000e+00> : vector<8xf32>
    %44 = vector.multi_reduction <add>, %43, %cst_9 [1] : vector<8x256xf32> to vector<8xf32>
    %45 = vector.shape_cast %44 : vector<8xf32> to vector<8x1xf32>
    %cst_10 = arith.constant dense<0.000000e+00> : vector<1xf32>
    %46 = vector.multi_reduction <add>, %45, %cst_10 [0] : vector<8x1xf32> to vector<1xf32>
    %47 = vector.shape_cast %46 : vector<1xf32> to vector<1x1xf32>
    %48 = arith.addf %9, %47 : vector<1x1xf32>
    %c1_i32_11 = arith.constant 1 : i32
    %c0_12 = arith.constant 0 : index
    %c0_13 = arith.constant 0 : index
    %49 = arith.index_cast %c1_i32_11 : i32 to index
    %c0_14 = arith.constant 0 : index
    %c0_15 = arith.constant 0 : index
    %50 = vector.load %arg2[%c0_12, %c0_13, %49, %c0_14, %c0_15] : memref<1x4x2x8x256xf32, #tpu.memory_space<vmem>>, vector<1x1x1x8x256xf32>
    %51 = vector.shape_cast %50 : vector<1x1x1x8x256xf32> to vector<8x256xf32>
    %c1_i32_16 = arith.constant 1 : i32
    %52 = tpu.dynamic_rotate %51 by %c1_i32_16 dim 0 : vector<8x256xf32>, i32 -> vector<8x256xf32>
    %53 = arith.mulf %52, %4 : vector<8x256xf32>
    %c7_i32_17 = arith.constant 7 : i32
    %54 = tpu.dynamic_rotate %51 by %c7_i32_17 dim 0 : vector<8x256xf32>, i32 -> vector<8x256xf32>
    %55 = arith.mulf %54, %8 : vector<8x256xf32>
    %c2_i32_18 = arith.constant 2 : i32
    %56 = arith.muli %arg1, %c2_i32_18 : i32
    %c0_i32_19 = arith.constant 0 : i32
    %57 = arith.addi %c0_i32_19, %56 : i32
    %58 = arith.addi %57, %c1_i32_11 : i32
    %c0_20 = arith.constant 0 : index
    %59 = arith.index_cast %58 : i32 to index
    %60 = memref.load %arg3[%c0_20, %59] : memref<6x64xf32, #tpu.memory_space<smem>>
    %61 = vector.broadcast %60 : f32 to vector<8x256xf32>
    %62 = arith.mulf %61, %53 : vector<8x256xf32>
    %c1_21 = arith.constant 1 : index
    %63 = arith.index_cast %58 : i32 to index
    %64 = memref.load %arg3[%c1_21, %63] : memref<6x64xf32, #tpu.memory_space<smem>>
    %65 = vector.broadcast %64 : f32 to vector<8x256xf32>
    %66 = arith.mulf %65, %51 : vector<8x256xf32>
    %67 = arith.addf %62, %66 : vector<8x256xf32>
    %c2_22 = arith.constant 2 : index
    %68 = arith.index_cast %58 : i32 to index
    %69 = memref.load %arg3[%c2_22, %68] : memref<6x64xf32, #tpu.memory_space<smem>>
    %70 = vector.broadcast %69 : f32 to vector<8x256xf32>
    %71 = arith.mulf %70, %55 : vector<8x256xf32>
    %72 = arith.addf %67, %71 : vector<8x256xf32>
    %c3_23 = arith.constant 3 : index
    %73 = arith.index_cast %58 : i32 to index
    %74 = memref.load %arg3[%c3_23, %73] : memref<6x64xf32, #tpu.memory_space<smem>>
    %75 = vector.broadcast %74 : f32 to vector<8x256xf32>
    %76 = arith.addf %72, %75 : vector<8x256xf32>
    %cst_24 = arith.constant dense<0.000000e+00> : vector<8xf32>
    %77 = vector.multi_reduction <add>, %76, %cst_24 [1] : vector<8x256xf32> to vector<8xf32>
    %78 = vector.shape_cast %77 : vector<8xf32> to vector<8x1xf32>
    %cst_25 = arith.constant dense<0.000000e+00> : vector<1xf32>
    %79 = vector.multi_reduction <add>, %78, %cst_25 [0] : vector<8x1xf32> to vector<1xf32>
    %80 = vector.shape_cast %79 : vector<1xf32> to vector<1x1xf32>
    %81 = arith.addf %42, %80 : vector<1x1xf32>
    %82 = arith.mulf %76, %76 : vector<8x256xf32>
    %cst_26 = arith.constant dense<0.000000e+00> : vector<8xf32>
    %83 = vector.multi_reduction <add>, %82, %cst_26 [1] : vector<8x256xf32> to vector<8xf32>
    %84 = vector.shape_cast %83 : vector<8xf32> to vector<8x1xf32>
    %cst_27 = arith.constant dense<0.000000e+00> : vector<1xf32>
    %85 = vector.multi_reduction <add>, %84, %cst_27 [0] : vector<8x1xf32> to vector<1xf32>
    %86 = vector.shape_cast %85 : vector<1xf32> to vector<1x1xf32>
    %87 = arith.addf %48, %86 : vector<1x1xf32>
    %c2_i32_28 = arith.constant 2 : i32
    %cst_29 = arith.constant 2.44140625E-4 : f32
    %88 = vector.broadcast %cst_29 : f32 to vector<1x1xf32>
    %89 = arith.mulf %81, %88 : vector<1x1xf32>
    %cst_30 = arith.constant 2.44140625E-4 : f32
    %90 = vector.broadcast %cst_30 : f32 to vector<1x1xf32>
    %91 = arith.mulf %87, %90 : vector<1x1xf32>
    %92 = arith.mulf %89, %89 : vector<1x1xf32>
    %93 = arith.subf %91, %92 : vector<1x1xf32>
    %cst_31 = arith.constant 0.000000e+00 : f32
    %94 = vector.broadcast %cst_31 : f32 to vector<1x1xf32>
    %95 = arith.maximumf %93, %94 : vector<1x1xf32>
    %cst_32 = arith.constant 9.99999974E-6 : f32
    %96 = vector.broadcast %cst_32 : f32 to vector<1x1xf32>
    %97 = arith.addf %95, %96 : vector<1x1xf32>
    %98 = math.rsqrt %97 : vector<1x1xf32>
    %c0_i32_33 = arith.constant 0 : i32
    %c0_34 = arith.constant 0 : index
    %c0_35 = arith.constant 0 : index
    %99 = arith.index_cast %c0_i32_33 : i32 to index
    %c0_36 = arith.constant 0 : index
    %c0_37 = arith.constant 0 : index
    %100 = vector.load %arg2[%c0_34, %c0_35, %99, %c0_36, %c0_37] : memref<1x4x2x8x256xf32, #tpu.memory_space<vmem>>, vector<1x1x1x8x256xf32>
    %101 = vector.shape_cast %100 : vector<1x1x1x8x256xf32> to vector<8x256xf32>
    %c1_i32_38 = arith.constant 1 : i32
    %102 = tpu.dynamic_rotate %101 by %c1_i32_38 dim 0 : vector<8x256xf32>, i32 -> vector<8x256xf32>
    %103 = arith.mulf %102, %4 : vector<8x256xf32>
    %c7_i32_39 = arith.constant 7 : i32
    %104 = tpu.dynamic_rotate %101 by %c7_i32_39 dim 0 : vector<8x256xf32>, i32 -> vector<8x256xf32>
    %105 = arith.mulf %104, %8 : vector<8x256xf32>
    %c2_i32_40 = arith.constant 2 : i32
    %106 = arith.muli %arg1, %c2_i32_40 : i32
    %c0_i32_41 = arith.constant 0 : i32
    %107 = arith.addi %c0_i32_41, %106 : i32
    %108 = arith.addi %107, %c0_i32_33 : i32
    %c0_42 = arith.constant 0 : index
    %109 = arith.index_cast %108 : i32 to index
    %110 = memref.load %arg3[%c0_42, %109] : memref<6x64xf32, #tpu.memory_space<smem>>
    %111 = vector.broadcast %110 : f32 to vector<8x256xf32>
    %112 = arith.mulf %111, %103 : vector<8x256xf32>
    %c1_43 = arith.constant 1 : index
    %113 = arith.index_cast %108 : i32 to index
    %114 = memref.load %arg3[%c1_43, %113] : memref<6x64xf32, #tpu.memory_space<smem>>
    %115 = vector.broadcast %114 : f32 to vector<8x256xf32>
    %116 = arith.mulf %115, %101 : vector<8x256xf32>
    %117 = arith.addf %112, %116 : vector<8x256xf32>
    %c2_44 = arith.constant 2 : index
    %118 = arith.index_cast %108 : i32 to index
    %119 = memref.load %arg3[%c2_44, %118] : memref<6x64xf32, #tpu.memory_space<smem>>
    %120 = vector.broadcast %119 : f32 to vector<8x256xf32>
    %121 = arith.mulf %120, %105 : vector<8x256xf32>
    %122 = arith.addf %117, %121 : vector<8x256xf32>
    %c3_45 = arith.constant 3 : index
    %123 = arith.index_cast %108 : i32 to index
    %124 = memref.load %arg3[%c3_45, %123] : memref<6x64xf32, #tpu.memory_space<smem>>
    %125 = vector.broadcast %124 : f32 to vector<8x256xf32>
    %126 = arith.addf %122, %125 : vector<8x256xf32>
    %c2_i32_46 = arith.constant 2 : i32
    %127 = arith.muli %arg1, %c2_i32_46 : i32
    %c0_i32_47 = arith.constant 0 : i32
    %128 = arith.addi %c0_i32_47, %127 : i32
    %129 = arith.addi %128, %c0_i32_33 : i32
    %c4 = arith.constant 4 : index
    %130 = arith.index_cast %129 : i32 to index
    %131 = memref.load %arg3[%c4, %130] : memref<6x64xf32, #tpu.memory_space<smem>>
    %132 = vector.broadcast %131 : f32 to vector<1x1xf32>
    %133 = arith.mulf %98, %132 : vector<1x1xf32>
    %c5 = arith.constant 5 : index
    %134 = arith.index_cast %129 : i32 to index
    %135 = memref.load %arg3[%c5, %134] : memref<6x64xf32, #tpu.memory_space<smem>>
    %136 = arith.mulf %89, %133 : vector<1x1xf32>
    %137 = vector.broadcast %135 : f32 to vector<1x1xf32>
    %138 = arith.subf %137, %136 : vector<1x1xf32>
    %139 = vector.broadcast %133 : vector<1x1xf32> to vector<8x256xf32>
    %140 = arith.mulf %126, %139 : vector<8x256xf32>
    %141 = vector.broadcast %138 : vector<1x1xf32> to vector<8x256xf32>
    %142 = arith.addf %140, %141 : vector<8x256xf32>
    %cst_48 = arith.constant 0.000000e+00 : f32
    %143 = vector.broadcast %cst_48 : f32 to vector<8x256xf32>
    %144 = arith.maximumf %142, %143 : vector<8x256xf32>
    %c4_i32 = arith.constant 4 : i32
    %145 = arith.muli %c0_i32_33, %c4_i32 : i32
    %c0_i32_49 = arith.constant 0 : i32
    %146 = arith.addi %145, %c0_i32_49 : i32
    %c0_50 = arith.constant 0 : index
    %147 = arith.index_cast %146 : i32 to index
    %c0_51 = arith.constant 0 : index
    %c0_52 = arith.constant 0 : index
    %148 = vector.load %arg4[%c0_50, %147, %c0_51, %c0_52] : memref<1x8x8x256xf32, #tpu.memory_space<vmem>>, vector<1x1x8x256xf32>
    %149 = vector.shape_cast %148 : vector<1x1x8x256xf32> to vector<8x256xf32>
    %150 = vector.shape_cast %144 : vector<8x256xf32> to vector<1x1x8x256xf32>
    tpu.vector_store %arg4[%c0_50, %147, %c0_51, %c0_52], %150 {strides = array<i32>} : memref<1x8x8x256xf32, #tpu.memory_space<vmem>>, vector<1x1x8x256xf32>,
    %c1_i32_53 = arith.constant 1 : i32
    %c0_54 = arith.constant 0 : index
    %c0_55 = arith.constant 0 : index
    %151 = arith.index_cast %c1_i32_53 : i32 to index
    %c0_56 = arith.constant 0 : index
    %c0_57 = arith.constant 0 : index
    %152 = vector.load %arg2[%c0_54, %c0_55, %151, %c0_56, %c0_57] : memref<1x4x2x8x256xf32, #tpu.memory_space<vmem>>, vector<1x1x1x8x256xf32>
    %153 = vector.shape_cast %152 : vector<1x1x1x8x256xf32> to vector<8x256xf32>
    %c1_i32_58 = arith.constant 1 : i32
    %154 = tpu.dynamic_rotate %153 by %c1_i32_58 dim 0 : vector<8x256xf32>, i32 -> vector<8x256xf32>
    %155 = arith.mulf %154, %4 : vector<8x256xf32>
    %c7_i32_59 = arith.constant 7 : i32
    %156 = tpu.dynamic_rotate %153 by %c7_i32_59 dim 0 : vector<8x256xf32>, i32 -> vector<8x256xf32>
    %157 = arith.mulf %156, %8 : vector<8x256xf32>
    %c2_i32_60 = arith.constant 2 : i32
    %158 = arith.muli %arg1, %c2_i32_60 : i32
    %c0_i32_61 = arith.constant 0 : i32
    %159 = arith.addi %c0_i32_61, %158 : i32
    %160 = arith.addi %159, %c1_i32_53 : i32
    %c0_62 = arith.constant 0 : index
    %161 = arith.index_cast %160 : i32 to index
    %162 = memref.load %arg3[%c0_62, %161] : memref<6x64xf32, #tpu.memory_space<smem>>
    %163 = vector.broadcast %162 : f32 to vector<8x256xf32>
    %164 = arith.mulf %163, %155 : vector<8x256xf32>
    %c1_63 = arith.constant 1 : index
    %165 = arith.index_cast %160 : i32 to index
    %166 = memref.load %arg3[%c1_63, %165] : memref<6x64xf32, #tpu.memory_space<smem>>
    %167 = vector.broadcast %166 : f32 to vector<8x256xf32>
    %168 = arith.mulf %167, %153 : vector<8x256xf32>
    %169 = arith.addf %164, %168 : vector<8x256xf32>
    %c2_64 = arith.constant 2 : index
    %170 = arith.index_cast %160 : i32 to index
    %171 = memref.load %arg3[%c2_64, %170] : memref<6x64xf32, #tpu.memory_space<smem>>
    %172 = vector.broadcast %171 : f32 to vector<8x256xf32>
    %173 = arith.mulf %172, %157 : vector<8x256xf32>
    %174 = arith.addf %169, %173 : vector<8x256xf32>
    %c3_65 = arith.constant 3 : index
    %175 = arith.index_cast %160 : i32 to index
    %176 = memref.load %arg3[%c3_65, %175] : memref<6x64xf32, #tpu.memory_space<smem>>
    %177 = vector.broadcast %176 : f32 to vector<8x256xf32>
    %178 = arith.addf %174, %177 : vector<8x256xf32>
    %c2_i32_66 = arith.constant 2 : i32
    %179 = arith.muli %arg1, %c2_i32_66 : i32
    %c0_i32_67 = arith.constant 0 : i32
    %180 = arith.addi %c0_i32_67, %179 : i32
    %181 = arith.addi %180, %c1_i32_53 : i32
    %c4_68 = arith.constant 4 : index
    %182 = arith.index_cast %181 : i32 to index
    %183 = memref.load %arg3[%c4_68, %182] : memref<6x64xf32, #tpu.memory_space<smem>>
    %184 = vector.broadcast %183 : f32 to vector<1x1xf32>
    %185 = arith.mulf %98, %184 : vector<1x1xf32>
    %c5_69 = arith.constant 5 : index
    %186 = arith.index_cast %181 : i32 to index
    %187 = memref.load %arg3[%c5_69, %186] : memref<6x64xf32, #tpu.memory_space<smem>>
    %188 = arith.mulf %89, %185 : vector<1x1xf32>
    %189 = vector.broadcast %187 : f32 to vector<1x1xf32>
    %190 = arith.subf %189, %188 : vector<1x1xf32>
    %191 = vector.broadcast %185 : vector<1x1xf32> to vector<8x256xf32>
    %192 = arith.mulf %178, %191 : vector<8x256xf32>
    %193 = vector.broadcast %190 : vector<1x1xf32> to vector<8x256xf32>
    %194 = arith.addf %192, %193 : vector<8x256xf32>
    %cst_70 = arith.constant 0.000000e+00 : f32
    %195 = vector.broadcast %cst_70 : f32 to vector<8x256xf32>
    %196 = arith.maximumf %194, %195 : vector<8x256xf32>
    %c4_i32_71 = arith.constant 4 : i32
    %197 = arith.muli %c1_i32_53, %c4_i32_71 : i32
    %c0_i32_72 = arith.constant 0 : i32
    %198 = arith.addi %197, %c0_i32_72 : i32
    %c0_73 = arith.constant 0 : index
    %199 = arith.index_cast %198 : i32 to index
    %c0_74 = arith.constant 0 : index
    %c0_75 = arith.constant 0 : index
    %200 = vector.load %arg4[%c0_73, %199, %c0_74, %c0_75] : memref<1x8x8x256xf32, #tpu.memory_space<vmem>>, vector<1x1x8x256xf32>
    %201 = vector.shape_cast %200 : vector<1x1x8x256xf32> to vector<8x256xf32>
    %202 = vector.shape_cast %196 : vector<8x256xf32> to vector<1x1x8x256xf32>
    tpu.vector_store %arg4[%c0_73, %199, %c0_74, %c0_75], %202 {strides = array<i32>} : memref<1x8x8x256xf32, #tpu.memory_space<vmem>>, vector<1x1x8x256xf32>,
    %c2_i32_76 = arith.constant 2 : i32
    %cst_77 = arith.constant 0.000000e+00 : f32
    %203 = vector.broadcast %cst_77 : f32 to vector<1x1xf32>
    %c0_i32_78 = arith.constant 0 : i32
    %c0_79 = arith.constant 0 : index
    %c1_80 = arith.constant 1 : index
    %204 = arith.index_cast %c0_i32_78 : i32 to index
    %c0_81 = arith.constant 0 : index
    %c0_82 = arith.constant 0 : index
    %205 = vector.load %arg2[%c0_79, %c1_80, %204, %c0_81, %c0_82] : memref<1x4x2x8x256xf32, #tpu.memory_space<vmem>>, vector<1x1x1x8x256xf32>
    %206 = vector.shape_cast %205 : vector<1x1x1x8x256xf32> to vector<8x256xf32>
    %c1_i32_83 = arith.constant 1 : i32
    %207 = tpu.dynamic_rotate %206 by %c1_i32_83 dim 0 : vector<8x256xf32>, i32 -> vector<8x256xf32>
    %208 = arith.mulf %207, %4 : vector<8x256xf32>
    %c7_i32_84 = arith.constant 7 : i32
    %209 = tpu.dynamic_rotate %206 by %c7_i32_84 dim 0 : vector<8x256xf32>, i32 -> vector<8x256xf32>
    %210 = arith.mulf %209, %8 : vector<8x256xf32>
    %c2_i32_85 = arith.constant 2 : i32
    %211 = arith.muli %arg1, %c2_i32_85 : i32
    %c16_i32 = arith.constant 16 : i32
    %212 = arith.addi %c16_i32, %211 : i32
    %213 = arith.addi %212, %c0_i32_78 : i32
    %c0_86 = arith.constant 0 : index
    %214 = arith.index_cast %213 : i32 to index
    %215 = memref.load %arg3[%c0_86, %214] : memref<6x64xf32, #tpu.memory_space<smem>>
    %216 = vector.broadcast %215 : f32 to vector<8x256xf32>
    %217 = arith.mulf %216, %208 : vector<8x256xf32>
    %c1_87 = arith.constant 1 : index
    %218 = arith.index_cast %213 : i32 to index
    %219 = memref.load %arg3[%c1_87, %218] : memref<6x64xf32, #tpu.memory_space<smem>>
    %220 = vector.broadcast %219 : f32 to vector<8x256xf32>
    %221 = arith.mulf %220, %206 : vector<8x256xf32>
    %222 = arith.addf %217, %221 : vector<8x256xf32>
    %c2_88 = arith.constant 2 : index
    %223 = arith.index_cast %213 : i32 to index
    %224 = memref.load %arg3[%c2_88, %223] : memref<6x64xf32, #tpu.memory_space<smem>>
    %225 = vector.broadcast %224 : f32 to vector<8x256xf32>
    %226 = arith.mulf %225, %210 : vector<8x256xf32>
    %227 = arith.addf %222, %226 : vector<8x256xf32>
    %c3_89 = arith.constant 3 : index
    %228 = arith.index_cast %213 : i32 to index
    %229 = memref.load %arg3[%c3_89, %228] : memref<6x64xf32, #tpu.memory_space<smem>>
    %230 = vector.broadcast %229 : f32 to vector<8x256xf32>
    %231 = arith.addf %227, %230 : vector<8x256xf32>
    %cst_90 = arith.constant dense<0.000000e+00> : vector<8xf32>
    %232 = vector.multi_reduction <add>, %231, %cst_90 [1] : vector<8x256xf32> to vector<8xf32>
    %233 = vector.shape_cast %232 : vector<8xf32> to vector<8x1xf32>
    %cst_91 = arith.constant dense<0.000000e+00> : vector<1xf32>
    %234 = vector.multi_reduction <add>, %233, %cst_91 [0] : vector<8x1xf32> to vector<1xf32>
    %235 = vector.shape_cast %234 : vector<1xf32> to vector<1x1xf32>
    %236 = arith.addf %203, %235 : vector<1x1xf32>
    %237 = arith.mulf %231, %231 : vector<8x256xf32>
    %cst_92 = arith.constant dense<0.000000e+00> : vector<8xf32>
    %238 = vector.multi_reduction <add>, %237, %cst_92 [1] : vector<8x256xf32> to vector<8xf32>
    %239 = vector.shape_cast %238 : vector<8xf32> to vector<8x1xf32>
    %cst_93 = arith.constant dense<0.000000e+00> : vector<1xf32>
    %240 = vector.multi_reduction <add>, %239, %cst_93 [0] : vector<8x1xf32> to vector<1xf32>
    %241 = vector.shape_cast %240 : vector<1xf32> to vector<1x1xf32>
    %242 = arith.addf %203, %241 : vector<1x1xf32>
    %c1_i32_94 = arith.constant 1 : i32
    %c0_95 = arith.constant 0 : index
    %c1_96 = arith.constant 1 : index
    %243 = arith.index_cast %c1_i32_94 : i32 to index
    %c0_97 = arith.constant 0 : index
    %c0_98 = arith.constant 0 : index
    %244 = vector.load %arg2[%c0_95, %c1_96, %243, %c0_97, %c0_98] : memref<1x4x2x8x256xf32, #tpu.memory_space<vmem>>, vector<1x1x1x8x256xf32>
    %245 = vector.shape_cast %244 : vector<1x1x1x8x256xf32> to vector<8x256xf32>
    %c1_i32_99 = arith.constant 1 : i32
    %246 = tpu.dynamic_rotate %245 by %c1_i32_99 dim 0 : vector<8x256xf32>, i32 -> vector<8x256xf32>
    %247 = arith.mulf %246, %4 : vector<8x256xf32>
    %c7_i32_100 = arith.constant 7 : i32
    %248 = tpu.dynamic_rotate %245 by %c7_i32_100 dim 0 : vector<8x256xf32>, i32 -> vector<8x256xf32>
    %249 = arith.mulf %248, %8 : vector<8x256xf32>
    %c2_i32_101 = arith.constant 2 : i32
    %250 = arith.muli %arg1, %c2_i32_101 : i32
    %c16_i32_102 = arith.constant 16 : i32
    %251 = arith.addi %c16_i32_102, %250 : i32
    %252 = arith.addi %251, %c1_i32_94 : i32
    %c0_103 = arith.constant 0 : index
    %253 = arith.index_cast %252 : i32 to index
    %254 = memref.load %arg3[%c0_103, %253] : memref<6x64xf32, #tpu.memory_space<smem>>
    %255 = vector.broadcast %254 : f32 to vector<8x256xf32>
    %256 = arith.mulf %255, %247 : vector<8x256xf32>
    %c1_104 = arith.constant 1 : index
    %257 = arith.index_cast %252 : i32 to index
    %258 = memref.load %arg3[%c1_104, %257] : memref<6x64xf32, #tpu.memory_space<smem>>
    %259 = vector.broadcast %258 : f32 to vector<8x256xf32>
    %260 = arith.mulf %259, %245 : vector<8x256xf32>
    %261 = arith.addf %256, %260 : vector<8x256xf32>
    %c2_105 = arith.constant 2 : index
    %262 = arith.index_cast %252 : i32 to index
    %263 = memref.load %arg3[%c2_105, %262] : memref<6x64xf32, #tpu.memory_space<smem>>
    %264 = vector.broadcast %263 : f32 to vector<8x256xf32>
    %265 = arith.mulf %264, %249 : vector<8x256xf32>
    %266 = arith.addf %261, %265 : vector<8x256xf32>
    %c3_106 = arith.constant 3 : index
    %267 = arith.index_cast %252 : i32 to index
    %268 = memref.load %arg3[%c3_106, %267] : memref<6x64xf32, #tpu.memory_space<smem>>
    %269 = vector.broadcast %268 : f32 to vector<8x256xf32>
    %270 = arith.addf %266, %269 : vector<8x256xf32>
    %cst_107 = arith.constant dense<0.000000e+00> : vector<8xf32>
    %271 = vector.multi_reduction <add>, %270, %cst_107 [1] : vector<8x256xf32> to vector<8xf32>
    %272 = vector.shape_cast %271 : vector<8xf32> to vector<8x1xf32>
    %cst_108 = arith.constant dense<0.000000e+00> : vector<1xf32>
    %273 = vector.multi_reduction <add>, %272, %cst_108 [0] : vector<8x1xf32> to vector<1xf32>
    %274 = vector.shape_cast %273 : vector<1xf32> to vector<1x1xf32>
    %275 = arith.addf %236, %274 : vector<1x1xf32>
    %276 = arith.mulf %270, %270 : vector<8x256xf32>
    %cst_109 = arith.constant dense<0.000000e+00> : vector<8xf32>
    %277 = vector.multi_reduction <add>, %276, %cst_109 [1] : vector<8x256xf32> to vector<8xf32>
    %278 = vector.shape_cast %277 : vector<8xf32> to vector<8x1xf32>
    %cst_110 = arith.constant dense<0.000000e+00> : vector<1xf32>
    %279 = vector.multi_reduction <add>, %278, %cst_110 [0] : vector<8x1xf32> to vector<1xf32>
    %280 = vector.shape_cast %279 : vector<1xf32> to vector<1x1xf32>
    %281 = arith.addf %242, %280 : vector<1x1xf32>
    %c2_i32_111 = arith.constant 2 : i32
    %cst_112 = arith.constant 2.44140625E-4 : f32
    %282 = vector.broadcast %cst_112 : f32 to vector<1x1xf32>
    %283 = arith.mulf %275, %282 : vector<1x1xf32>
    %cst_113 = arith.constant 2.44140625E-4 : f32
    %284 = vector.broadcast %cst_113 : f32 to vector<1x1xf32>
    %285 = arith.mulf %281, %284 : vector<1x1xf32>
    %286 = arith.mulf %283, %283 : vector<1x1xf32>
    %287 = arith.subf %285, %286 : vector<1x1xf32>
    %cst_114 = arith.constant 0.000000e+00 : f32
    %288 = vector.broadcast %cst_114 : f32 to vector<1x1xf32>
    %289 = arith.maximumf %287, %288 : vector<1x1xf32>
    %cst_115 = arith.constant 9.99999974E-6 : f32
    %290 = vector.broadcast %cst_115 : f32 to vector<1x1xf32>
    %291 = arith.addf %289, %290 : vector<1x1xf32>
    %292 = math.rsqrt %291 : vector<1x1xf32>
    %c0_i32_116 = arith.constant 0 : i32
    %c0_117 = arith.constant 0 : index
    %c1_118 = arith.constant 1 : index
    %293 = arith.index_cast %c0_i32_116 : i32 to index
    %c0_119 = arith.constant 0 : index
    %c0_120 = arith.constant 0 : index
    %294 = vector.load %arg2[%c0_117, %c1_118, %293, %c0_119, %c0_120] : memref<1x4x2x8x256xf32, #tpu.memory_space<vmem>>, vector<1x1x1x8x256xf32>
    %295 = vector.shape_cast %294 : vector<1x1x1x8x256xf32> to vector<8x256xf32>
    %c1_i32_121 = arith.constant 1 : i32
    %296 = tpu.dynamic_rotate %295 by %c1_i32_121 dim 0 : vector<8x256xf32>, i32 -> vector<8x256xf32>
    %297 = arith.mulf %296, %4 : vector<8x256xf32>
    %c7_i32_122 = arith.constant 7 : i32
    %298 = tpu.dynamic_rotate %295 by %c7_i32_122 dim 0 : vector<8x256xf32>, i32 -> vector<8x256xf32>
    %299 = arith.mulf %298, %8 : vector<8x256xf32>
    %c2_i32_123 = arith.constant 2 : i32
    %300 = arith.muli %arg1, %c2_i32_123 : i32
    %c16_i32_124 = arith.constant 16 : i32
    %301 = arith.addi %c16_i32_124, %300 : i32
    %302 = arith.addi %301, %c0_i32_116 : i32
    %c0_125 = arith.constant 0 : index
    %303 = arith.index_cast %302 : i32 to index
    %304 = memref.load %arg3[%c0_125, %303] : memref<6x64xf32, #tpu.memory_space<smem>>
    %305 = vector.broadcast %304 : f32 to vector<8x256xf32>
    %306 = arith.mulf %305, %297 : vector<8x256xf32>
    %c1_126 = arith.constant 1 : index
    %307 = arith.index_cast %302 : i32 to index
    %308 = memref.load %arg3[%c1_126, %307] : memref<6x64xf32, #tpu.memory_space<smem>>
    %309 = vector.broadcast %308 : f32 to vector<8x256xf32>
    %310 = arith.mulf %309, %295 : vector<8x256xf32>
    %311 = arith.addf %306, %310 : vector<8x256xf32>
    %c2_127 = arith.constant 2 : index
    %312 = arith.index_cast %302 : i32 to index
    %313 = memref.load %arg3[%c2_127, %312] : memref<6x64xf32, #tpu.memory_space<smem>>
    %314 = vector.broadcast %313 : f32 to vector<8x256xf32>
    %315 = arith.mulf %314, %299 : vector<8x256xf32>
    %316 = arith.addf %311, %315 : vector<8x256xf32>
    %c3_128 = arith.constant 3 : index
    %317 = arith.index_cast %302 : i32 to index
    %318 = memref.load %arg3[%c3_128, %317] : memref<6x64xf32, #tpu.memory_space<smem>>
    %319 = vector.broadcast %318 : f32 to vector<8x256xf32>
    %320 = arith.addf %316, %319 : vector<8x256xf32>
    %c2_i32_129 = arith.constant 2 : i32
    %321 = arith.muli %arg1, %c2_i32_129 : i32
    %c16_i32_130 = arith.constant 16 : i32
    %322 = arith.addi %c16_i32_130, %321 : i32
    %323 = arith.addi %322, %c0_i32_116 : i32
    %c4_131 = arith.constant 4 : index
    %324 = arith.index_cast %323 : i32 to index
    %325 = memref.load %arg3[%c4_131, %324] : memref<6x64xf32, #tpu.memory_space<smem>>
    %326 = vector.broadcast %325 : f32 to vector<1x1xf32>
    %327 = arith.mulf %292, %326 : vector<1x1xf32>
    %c5_132 = arith.constant 5 : index
    %328 = arith.index_cast %323 : i32 to index
    %329 = memref.load %arg3[%c5_132, %328] : memref<6x64xf32, #tpu.memory_space<smem>>
    %330 = arith.mulf %283, %327 : vector<1x1xf32>
    %331 = vector.broadcast %329 : f32 to vector<1x1xf32>
    %332 = arith.subf %331, %330 : vector<1x1xf32>
    %333 = vector.broadcast %327 : vector<1x1xf32> to vector<8x256xf32>
    %334 = arith.mulf %320, %333 : vector<8x256xf32>
    %335 = vector.broadcast %332 : vector<1x1xf32> to vector<8x256xf32>
    %336 = arith.addf %334, %335 : vector<8x256xf32>
    %cst_133 = arith.constant 0.000000e+00 : f32
    %337 = vector.broadcast %cst_133 : f32 to vector<8x256xf32>
    %338 = arith.maximumf %336, %337 : vector<8x256xf32>
    %c4_i32_134 = arith.constant 4 : i32
    %339 = arith.muli %c0_i32_116, %c4_i32_134 : i32
    %c1_i32_135 = arith.constant 1 : i32
    %340 = arith.addi %339, %c1_i32_135 : i32
    %c0_136 = arith.constant 0 : index
    %341 = arith.index_cast %340 : i32 to index
    %c0_137 = arith.constant 0 : index
    %c0_138 = arith.constant 0 : index
    %342 = vector.load %arg4[%c0_136, %341, %c0_137, %c0_138] : memref<1x8x8x256xf32, #tpu.memory_space<vmem>>, vector<1x1x8x256xf32>
    %343 = vector.shape_cast %342 : vector<1x1x8x256xf32> to vector<8x256xf32>
    %344 = vector.shape_cast %338 : vector<8x256xf32> to vector<1x1x8x256xf32>
    tpu.vector_store %arg4[%c0_136, %341, %c0_137, %c0_138], %344 {strides = array<i32>} : memref<1x8x8x256xf32, #tpu.memory_space<vmem>>, vector<1x1x8x256xf32>,
    %c1_i32_139 = arith.constant 1 : i32
    %c0_140 = arith.constant 0 : index
    %c1_141 = arith.constant 1 : index
    %345 = arith.index_cast %c1_i32_139 : i32 to index
    %c0_142 = arith.constant 0 : index
    %c0_143 = arith.constant 0 : index
    %346 = vector.load %arg2[%c0_140, %c1_141, %345, %c0_142, %c0_143] : memref<1x4x2x8x256xf32, #tpu.memory_space<vmem>>, vector<1x1x1x8x256xf32>
    %347 = vector.shape_cast %346 : vector<1x1x1x8x256xf32> to vector<8x256xf32>
    %c1_i32_144 = arith.constant 1 : i32
    %348 = tpu.dynamic_rotate %347 by %c1_i32_144 dim 0 : vector<8x256xf32>, i32 -> vector<8x256xf32>
    %349 = arith.mulf %348, %4 : vector<8x256xf32>
    %c7_i32_145 = arith.constant 7 : i32
    %350 = tpu.dynamic_rotate %347 by %c7_i32_145 dim 0 : vector<8x256xf32>, i32 -> vector<8x256xf32>
    %351 = arith.mulf %350, %8 : vector<8x256xf32>
    %c2_i32_146 = arith.constant 2 : i32
    %352 = arith.muli %arg1, %c2_i32_146 : i32
    %c16_i32_147 = arith.constant 16 : i32
    %353 = arith.addi %c16_i32_147, %352 : i32
    %354 = arith.addi %353, %c1_i32_139 : i32
    %c0_148 = arith.constant 0 : index
    %355 = arith.index_cast %354 : i32 to index
    %356 = memref.load %arg3[%c0_148, %355] : memref<6x64xf32, #tpu.memory_space<smem>>
    %357 = vector.broadcast %356 : f32 to vector<8x256xf32>
    %358 = arith.mulf %357, %349 : vector<8x256xf32>
    %c1_149 = arith.constant 1 : index
    %359 = arith.index_cast %354 : i32 to index
    %360 = memref.load %arg3[%c1_149, %359] : memref<6x64xf32, #tpu.memory_space<smem>>
    %361 = vector.broadcast %360 : f32 to vector<8x256xf32>
    %362 = arith.mulf %361, %347 : vector<8x256xf32>
    %363 = arith.addf %358, %362 : vector<8x256xf32>
    %c2_150 = arith.constant 2 : index
    %364 = arith.index_cast %354 : i32 to index
    %365 = memref.load %arg3[%c2_150, %364] : memref<6x64xf32, #tpu.memory_space<smem>>
    %366 = vector.broadcast %365 : f32 to vector<8x256xf32>
    %367 = arith.mulf %366, %351 : vector<8x256xf32>
    %368 = arith.addf %363, %367 : vector<8x256xf32>
    %c3_151 = arith.constant 3 : index
    %369 = arith.index_cast %354 : i32 to index
    %370 = memref.load %arg3[%c3_151, %369] : memref<6x64xf32, #tpu.memory_space<smem>>
    %371 = vector.broadcast %370 : f32 to vector<8x256xf32>
    %372 = arith.addf %368, %371 : vector<8x256xf32>
    %c2_i32_152 = arith.constant 2 : i32
    %373 = arith.muli %arg1, %c2_i32_152 : i32
    %c16_i32_153 = arith.constant 16 : i32
    %374 = arith.addi %c16_i32_153, %373 : i32
    %375 = arith.addi %374, %c1_i32_139 : i32
    %c4_154 = arith.constant 4 : index
    %376 = arith.index_cast %375 : i32 to index
    %377 = memref.load %arg3[%c4_154, %376] : memref<6x64xf32, #tpu.memory_space<smem>>
    %378 = vector.broadcast %377 : f32 to vector<1x1xf32>
    %379 = arith.mulf %292, %378 : vector<1x1xf32>
    %c5_155 = arith.constant 5 : index
    %380 = arith.index_cast %375 : i32 to index
    %381 = memref.load %arg3[%c5_155, %380] : memref<6x64xf32, #tpu.memory_space<smem>>
    %382 = arith.mulf %283, %379 : vector<1x1xf32>
    %383 = vector.broadcast %381 : f32 to vector<1x1xf32>
    %384 = arith.subf %383, %382 : vector<1x1xf32>
    %385 = vector.broadcast %379 : vector<1x1xf32> to vector<8x256xf32>
    %386 = arith.mulf %372, %385 : vector<8x256xf32>
    %387 = vector.broadcast %384 : vector<1x1xf32> to vector<8x256xf32>
    %388 = arith.addf %386, %387 : vector<8x256xf32>
    %cst_156 = arith.constant 0.000000e+00 : f32
    %389 = vector.broadcast %cst_156 : f32 to vector<8x256xf32>
    %390 = arith.maximumf %388, %389 : vector<8x256xf32>
    %c4_i32_157 = arith.constant 4 : i32
    %391 = arith.muli %c1_i32_139, %c4_i32_157 : i32
    %c1_i32_158 = arith.constant 1 : i32
    %392 = arith.addi %391, %c1_i32_158 : i32
    %c0_159 = arith.constant 0 : index
    %393 = arith.index_cast %392 : i32 to index
    %c0_160 = arith.constant 0 : index
    %c0_161 = arith.constant 0 : index
    %394 = vector.load %arg4[%c0_159, %393, %c0_160, %c0_161] : memref<1x8x8x256xf32, #tpu.memory_space<vmem>>, vector<1x1x8x256xf32>
    %395 = vector.shape_cast %394 : vector<1x1x8x256xf32> to vector<8x256xf32>
    %396 = vector.shape_cast %390 : vector<8x256xf32> to vector<1x1x8x256xf32>
    tpu.vector_store %arg4[%c0_159, %393, %c0_160, %c0_161], %396 {strides = array<i32>} : memref<1x8x8x256xf32, #tpu.memory_space<vmem>>, vector<1x1x8x256xf32>,
    %c2_i32_162 = arith.constant 2 : i32
    %cst_163 = arith.constant 0.000000e+00 : f32
    %397 = vector.broadcast %cst_163 : f32 to vector<1x1xf32>
    %c0_i32_164 = arith.constant 0 : i32
    %c0_165 = arith.constant 0 : index
    %c2_166 = arith.constant 2 : index
    %398 = arith.index_cast %c0_i32_164 : i32 to index
    %c0_167 = arith.constant 0 : index
    %c0_168 = arith.constant 0 : index
    %399 = vector.load %arg2[%c0_165, %c2_166, %398, %c0_167, %c0_168] : memref<1x4x2x8x256xf32, #tpu.memory_space<vmem>>, vector<1x1x1x8x256xf32>
    %400 = vector.shape_cast %399 : vector<1x1x1x8x256xf32> to vector<8x256xf32>
    %c1_i32_169 = arith.constant 1 : i32
    %401 = tpu.dynamic_rotate %400 by %c1_i32_169 dim 0 : vector<8x256xf32>, i32 -> vector<8x256xf32>
    %402 = arith.mulf %401, %4 : vector<8x256xf32>
    %c7_i32_170 = arith.constant 7 : i32
    %403 = tpu.dynamic_rotate %400 by %c7_i32_170 dim 0 : vector<8x256xf32>, i32 -> vector<8x256xf32>
    %404 = arith.mulf %403, %8 : vector<8x256xf32>
    %c2_i32_171 = arith.constant 2 : i32
    %405 = arith.muli %arg1, %c2_i32_171 : i32
    %c32_i32 = arith.constant 32 : i32
    %406 = arith.addi %c32_i32, %405 : i32
    %407 = arith.addi %406, %c0_i32_164 : i32
    %c0_172 = arith.constant 0 : index
    %408 = arith.index_cast %407 : i32 to index
    %409 = memref.load %arg3[%c0_172, %408] : memref<6x64xf32, #tpu.memory_space<smem>>
    %410 = vector.broadcast %409 : f32 to vector<8x256xf32>
    %411 = arith.mulf %410, %402 : vector<8x256xf32>
    %c1_173 = arith.constant 1 : index
    %412 = arith.index_cast %407 : i32 to index
    %413 = memref.load %arg3[%c1_173, %412] : memref<6x64xf32, #tpu.memory_space<smem>>
    %414 = vector.broadcast %413 : f32 to vector<8x256xf32>
    %415 = arith.mulf %414, %400 : vector<8x256xf32>
    %416 = arith.addf %411, %415 : vector<8x256xf32>
    %c2_174 = arith.constant 2 : index
    %417 = arith.index_cast %407 : i32 to index
    %418 = memref.load %arg3[%c2_174, %417] : memref<6x64xf32, #tpu.memory_space<smem>>
    %419 = vector.broadcast %418 : f32 to vector<8x256xf32>
    %420 = arith.mulf %419, %404 : vector<8x256xf32>
    %421 = arith.addf %416, %420 : vector<8x256xf32>
    %c3_175 = arith.constant 3 : index
    %422 = arith.index_cast %407 : i32 to index
    %423 = memref.load %arg3[%c3_175, %422] : memref<6x64xf32, #tpu.memory_space<smem>>
    %424 = vector.broadcast %423 : f32 to vector<8x256xf32>
    %425 = arith.addf %421, %424 : vector<8x256xf32>
    %cst_176 = arith.constant dense<0.000000e+00> : vector<8xf32>
    %426 = vector.multi_reduction <add>, %425, %cst_176 [1] : vector<8x256xf32> to vector<8xf32>
    %427 = vector.shape_cast %426 : vector<8xf32> to vector<8x1xf32>
    %cst_177 = arith.constant dense<0.000000e+00> : vector<1xf32>
    %428 = vector.multi_reduction <add>, %427, %cst_177 [0] : vector<8x1xf32> to vector<1xf32>
    %429 = vector.shape_cast %428 : vector<1xf32> to vector<1x1xf32>
    %430 = arith.addf %397, %429 : vector<1x1xf32>
    %431 = arith.mulf %425, %425 : vector<8x256xf32>
    %cst_178 = arith.constant dense<0.000000e+00> : vector<8xf32>
    %432 = vector.multi_reduction <add>, %431, %cst_178 [1] : vector<8x256xf32> to vector<8xf32>
    %433 = vector.shape_cast %432 : vector<8xf32> to vector<8x1xf32>
    %cst_179 = arith.constant dense<0.000000e+00> : vector<1xf32>
    %434 = vector.multi_reduction <add>, %433, %cst_179 [0] : vector<8x1xf32> to vector<1xf32>
    %435 = vector.shape_cast %434 : vector<1xf32> to vector<1x1xf32>
    %436 = arith.addf %397, %435 : vector<1x1xf32>
    %c1_i32_180 = arith.constant 1 : i32
    %c0_181 = arith.constant 0 : index
    %c2_182 = arith.constant 2 : index
    %437 = arith.index_cast %c1_i32_180 : i32 to index
    %c0_183 = arith.constant 0 : index
    %c0_184 = arith.constant 0 : index
    %438 = vector.load %arg2[%c0_181, %c2_182, %437, %c0_183, %c0_184] : memref<1x4x2x8x256xf32, #tpu.memory_space<vmem>>, vector<1x1x1x8x256xf32>
    %439 = vector.shape_cast %438 : vector<1x1x1x8x256xf32> to vector<8x256xf32>
    %c1_i32_185 = arith.constant 1 : i32
    %440 = tpu.dynamic_rotate %439 by %c1_i32_185 dim 0 : vector<8x256xf32>, i32 -> vector<8x256xf32>
    %441 = arith.mulf %440, %4 : vector<8x256xf32>
    %c7_i32_186 = arith.constant 7 : i32
    %442 = tpu.dynamic_rotate %439 by %c7_i32_186 dim 0 : vector<8x256xf32>, i32 -> vector<8x256xf32>
    %443 = arith.mulf %442, %8 : vector<8x256xf32>
    %c2_i32_187 = arith.constant 2 : i32
    %444 = arith.muli %arg1, %c2_i32_187 : i32
    %c32_i32_188 = arith.constant 32 : i32
    %445 = arith.addi %c32_i32_188, %444 : i32
    %446 = arith.addi %445, %c1_i32_180 : i32
    %c0_189 = arith.constant 0 : index
    %447 = arith.index_cast %446 : i32 to index
    %448 = memref.load %arg3[%c0_189, %447] : memref<6x64xf32, #tpu.memory_space<smem>>
    %449 = vector.broadcast %448 : f32 to vector<8x256xf32>
    %450 = arith.mulf %449, %441 : vector<8x256xf32>
    %c1_190 = arith.constant 1 : index
    %451 = arith.index_cast %446 : i32 to index
    %452 = memref.load %arg3[%c1_190, %451] : memref<6x64xf32, #tpu.memory_space<smem>>
    %453 = vector.broadcast %452 : f32 to vector<8x256xf32>
    %454 = arith.mulf %453, %439 : vector<8x256xf32>
    %455 = arith.addf %450, %454 : vector<8x256xf32>
    %c2_191 = arith.constant 2 : index
    %456 = arith.index_cast %446 : i32 to index
    %457 = memref.load %arg3[%c2_191, %456] : memref<6x64xf32, #tpu.memory_space<smem>>
    %458 = vector.broadcast %457 : f32 to vector<8x256xf32>
    %459 = arith.mulf %458, %443 : vector<8x256xf32>
    %460 = arith.addf %455, %459 : vector<8x256xf32>
    %c3_192 = arith.constant 3 : index
    %461 = arith.index_cast %446 : i32 to index
    %462 = memref.load %arg3[%c3_192, %461] : memref<6x64xf32, #tpu.memory_space<smem>>
    %463 = vector.broadcast %462 : f32 to vector<8x256xf32>
    %464 = arith.addf %460, %463 : vector<8x256xf32>
    %cst_193 = arith.constant dense<0.000000e+00> : vector<8xf32>
    %465 = vector.multi_reduction <add>, %464, %cst_193 [1] : vector<8x256xf32> to vector<8xf32>
    %466 = vector.shape_cast %465 : vector<8xf32> to vector<8x1xf32>
    %cst_194 = arith.constant dense<0.000000e+00> : vector<1xf32>
    %467 = vector.multi_reduction <add>, %466, %cst_194 [0] : vector<8x1xf32> to vector<1xf32>
    %468 = vector.shape_cast %467 : vector<1xf32> to vector<1x1xf32>
    %469 = arith.addf %430, %468 : vector<1x1xf32>
    %470 = arith.mulf %464, %464 : vector<8x256xf32>
    %cst_195 = arith.constant dense<0.000000e+00> : vector<8xf32>
    %471 = vector.multi_reduction <add>, %470, %cst_195 [1] : vector<8x256xf32> to vector<8xf32>
    %472 = vector.shape_cast %471 : vector<8xf32> to vector<8x1xf32>
    %cst_196 = arith.constant dense<0.000000e+00> : vector<1xf32>
    %473 = vector.multi_reduction <add>, %472, %cst_196 [0] : vector<8x1xf32> to vector<1xf32>
    %474 = vector.shape_cast %473 : vector<1xf32> to vector<1x1xf32>
    %475 = arith.addf %436, %474 : vector<1x1xf32>
    %c2_i32_197 = arith.constant 2 : i32
    %cst_198 = arith.constant 2.44140625E-4 : f32
    %476 = vector.broadcast %cst_198 : f32 to vector<1x1xf32>
    %477 = arith.mulf %469, %476 : vector<1x1xf32>
    %cst_199 = arith.constant 2.44140625E-4 : f32
    %478 = vector.broadcast %cst_199 : f32 to vector<1x1xf32>
    %479 = arith.mulf %475, %478 : vector<1x1xf32>
    %480 = arith.mulf %477, %477 : vector<1x1xf32>
    %481 = arith.subf %479, %480 : vector<1x1xf32>
    %cst_200 = arith.constant 0.000000e+00 : f32
    %482 = vector.broadcast %cst_200 : f32 to vector<1x1xf32>
    %483 = arith.maximumf %481, %482 : vector<1x1xf32>
    %cst_201 = arith.constant 9.99999974E-6 : f32
    %484 = vector.broadcast %cst_201 : f32 to vector<1x1xf32>
    %485 = arith.addf %483, %484 : vector<1x1xf32>
    %486 = math.rsqrt %485 : vector<1x1xf32>
    %c0_i32_202 = arith.constant 0 : i32
    %c0_203 = arith.constant 0 : index
    %c2_204 = arith.constant 2 : index
    %487 = arith.index_cast %c0_i32_202 : i32 to index
    %c0_205 = arith.constant 0 : index
    %c0_206 = arith.constant 0 : index
    %488 = vector.load %arg2[%c0_203, %c2_204, %487, %c0_205, %c0_206] : memref<1x4x2x8x256xf32, #tpu.memory_space<vmem>>, vector<1x1x1x8x256xf32>
    %489 = vector.shape_cast %488 : vector<1x1x1x8x256xf32> to vector<8x256xf32>
    %c1_i32_207 = arith.constant 1 : i32
    %490 = tpu.dynamic_rotate %489 by %c1_i32_207 dim 0 : vector<8x256xf32>, i32 -> vector<8x256xf32>
    %491 = arith.mulf %490, %4 : vector<8x256xf32>
    %c7_i32_208 = arith.constant 7 : i32
    %492 = tpu.dynamic_rotate %489 by %c7_i32_208 dim 0 : vector<8x256xf32>, i32 -> vector<8x256xf32>
    %493 = arith.mulf %492, %8 : vector<8x256xf32>
    %c2_i32_209 = arith.constant 2 : i32
    %494 = arith.muli %arg1, %c2_i32_209 : i32
    %c32_i32_210 = arith.constant 32 : i32
    %495 = arith.addi %c32_i32_210, %494 : i32
    %496 = arith.addi %495, %c0_i32_202 : i32
    %c0_211 = arith.constant 0 : index
    %497 = arith.index_cast %496 : i32 to index
    %498 = memref.load %arg3[%c0_211, %497] : memref<6x64xf32, #tpu.memory_space<smem>>
    %499 = vector.broadcast %498 : f32 to vector<8x256xf32>
    %500 = arith.mulf %499, %491 : vector<8x256xf32>
    %c1_212 = arith.constant 1 : index
    %501 = arith.index_cast %496 : i32 to index
    %502 = memref.load %arg3[%c1_212, %501] : memref<6x64xf32, #tpu.memory_space<smem>>
    %503 = vector.broadcast %502 : f32 to vector<8x256xf32>
    %504 = arith.mulf %503, %489 : vector<8x256xf32>
    %505 = arith.addf %500, %504 : vector<8x256xf32>
    %c2_213 = arith.constant 2 : index
    %506 = arith.index_cast %496 : i32 to index
    %507 = memref.load %arg3[%c2_213, %506] : memref<6x64xf32, #tpu.memory_space<smem>>
    %508 = vector.broadcast %507 : f32 to vector<8x256xf32>
    %509 = arith.mulf %508, %493 : vector<8x256xf32>
    %510 = arith.addf %505, %509 : vector<8x256xf32>
    %c3_214 = arith.constant 3 : index
    %511 = arith.index_cast %496 : i32 to index
    %512 = memref.load %arg3[%c3_214, %511] : memref<6x64xf32, #tpu.memory_space<smem>>
    %513 = vector.broadcast %512 : f32 to vector<8x256xf32>
    %514 = arith.addf %510, %513 : vector<8x256xf32>
    %c2_i32_215 = arith.constant 2 : i32
    %515 = arith.muli %arg1, %c2_i32_215 : i32
    %c32_i32_216 = arith.constant 32 : i32
    %516 = arith.addi %c32_i32_216, %515 : i32
    %517 = arith.addi %516, %c0_i32_202 : i32
    %c4_217 = arith.constant 4 : index
    %518 = arith.index_cast %517 : i32 to index
    %519 = memref.load %arg3[%c4_217, %518] : memref<6x64xf32, #tpu.memory_space<smem>>
    %520 = vector.broadcast %519 : f32 to vector<1x1xf32>
    %521 = arith.mulf %486, %520 : vector<1x1xf32>
    %c5_218 = arith.constant 5 : index
    %522 = arith.index_cast %517 : i32 to index
    %523 = memref.load %arg3[%c5_218, %522] : memref<6x64xf32, #tpu.memory_space<smem>>
    %524 = arith.mulf %477, %521 : vector<1x1xf32>
    %525 = vector.broadcast %523 : f32 to vector<1x1xf32>
    %526 = arith.subf %525, %524 : vector<1x1xf32>
    %527 = vector.broadcast %521 : vector<1x1xf32> to vector<8x256xf32>
    %528 = arith.mulf %514, %527 : vector<8x256xf32>
    %529 = vector.broadcast %526 : vector<1x1xf32> to vector<8x256xf32>
    %530 = arith.addf %528, %529 : vector<8x256xf32>
    %cst_219 = arith.constant 0.000000e+00 : f32
    %531 = vector.broadcast %cst_219 : f32 to vector<8x256xf32>
    %532 = arith.maximumf %530, %531 : vector<8x256xf32>
    %c4_i32_220 = arith.constant 4 : i32
    %533 = arith.muli %c0_i32_202, %c4_i32_220 : i32
    %c2_i32_221 = arith.constant 2 : i32
    %534 = arith.addi %533, %c2_i32_221 : i32
    %c0_222 = arith.constant 0 : index
    %535 = arith.index_cast %534 : i32 to index
    %c0_223 = arith.constant 0 : index
    %c0_224 = arith.constant 0 : index
    %536 = vector.load %arg4[%c0_222, %535, %c0_223, %c0_224] : memref<1x8x8x256xf32, #tpu.memory_space<vmem>>, vector<1x1x8x256xf32>
    %537 = vector.shape_cast %536 : vector<1x1x8x256xf32> to vector<8x256xf32>
    %538 = vector.shape_cast %532 : vector<8x256xf32> to vector<1x1x8x256xf32>
    tpu.vector_store %arg4[%c0_222, %535, %c0_223, %c0_224], %538 {strides = array<i32>} : memref<1x8x8x256xf32, #tpu.memory_space<vmem>>, vector<1x1x8x256xf32>,
    %c1_i32_225 = arith.constant 1 : i32
    %c0_226 = arith.constant 0 : index
    %c2_227 = arith.constant 2 : index
    %539 = arith.index_cast %c1_i32_225 : i32 to index
    %c0_228 = arith.constant 0 : index
    %c0_229 = arith.constant 0 : index
    %540 = vector.load %arg2[%c0_226, %c2_227, %539, %c0_228, %c0_229] : memref<1x4x2x8x256xf32, #tpu.memory_space<vmem>>, vector<1x1x1x8x256xf32>
    %541 = vector.shape_cast %540 : vector<1x1x1x8x256xf32> to vector<8x256xf32>
    %c1_i32_230 = arith.constant 1 : i32
    %542 = tpu.dynamic_rotate %541 by %c1_i32_230 dim 0 : vector<8x256xf32>, i32 -> vector<8x256xf32>
    %543 = arith.mulf %542, %4 : vector<8x256xf32>
    %c7_i32_231 = arith.constant 7 : i32
    %544 = tpu.dynamic_rotate %541 by %c7_i32_231 dim 0 : vector<8x256xf32>, i32 -> vector<8x256xf32>
    %545 = arith.mulf %544, %8 : vector<8x256xf32>
    %c2_i32_232 = arith.constant 2 : i32
    %546 = arith.muli %arg1, %c2_i32_232 : i32
    %c32_i32_233 = arith.constant 32 : i32
    %547 = arith.addi %c32_i32_233, %546 : i32
    %548 = arith.addi %547, %c1_i32_225 : i32
    %c0_234 = arith.constant 0 : index
    %549 = arith.index_cast %548 : i32 to index
    %550 = memref.load %arg3[%c0_234, %549] : memref<6x64xf32, #tpu.memory_space<smem>>
    %551 = vector.broadcast %550 : f32 to vector<8x256xf32>
    %552 = arith.mulf %551, %543 : vector<8x256xf32>
    %c1_235 = arith.constant 1 : index
    %553 = arith.index_cast %548 : i32 to index
    %554 = memref.load %arg3[%c1_235, %553] : memref<6x64xf32, #tpu.memory_space<smem>>
    %555 = vector.broadcast %554 : f32 to vector<8x256xf32>
    %556 = arith.mulf %555, %541 : vector<8x256xf32>
    %557 = arith.addf %552, %556 : vector<8x256xf32>
    %c2_236 = arith.constant 2 : index
    %558 = arith.index_cast %548 : i32 to index
    %559 = memref.load %arg3[%c2_236, %558] : memref<6x64xf32, #tpu.memory_space<smem>>
    %560 = vector.broadcast %559 : f32 to vector<8x256xf32>
    %561 = arith.mulf %560, %545 : vector<8x256xf32>
    %562 = arith.addf %557, %561 : vector<8x256xf32>
    %c3_237 = arith.constant 3 : index
    %563 = arith.index_cast %548 : i32 to index
    %564 = memref.load %arg3[%c3_237, %563] : memref<6x64xf32, #tpu.memory_space<smem>>
    %565 = vector.broadcast %564 : f32 to vector<8x256xf32>
    %566 = arith.addf %562, %565 : vector<8x256xf32>
    %c2_i32_238 = arith.constant 2 : i32
    %567 = arith.muli %arg1, %c2_i32_238 : i32
    %c32_i32_239 = arith.constant 32 : i32
    %568 = arith.addi %c32_i32_239, %567 : i32
    %569 = arith.addi %568, %c1_i32_225 : i32
    %c4_240 = arith.constant 4 : index
    %570 = arith.index_cast %569 : i32 to index
    %571 = memref.load %arg3[%c4_240, %570] : memref<6x64xf32, #tpu.memory_space<smem>>
    %572 = vector.broadcast %571 : f32 to vector<1x1xf32>
    %573 = arith.mulf %486, %572 : vector<1x1xf32>
    %c5_241 = arith.constant 5 : index
    %574 = arith.index_cast %569 : i32 to index
    %575 = memref.load %arg3[%c5_241, %574] : memref<6x64xf32, #tpu.memory_space<smem>>
    %576 = arith.mulf %477, %573 : vector<1x1xf32>
    %577 = vector.broadcast %575 : f32 to vector<1x1xf32>
    %578 = arith.subf %577, %576 : vector<1x1xf32>
    %579 = vector.broadcast %573 : vector<1x1xf32> to vector<8x256xf32>
    %580 = arith.mulf %566, %579 : vector<8x256xf32>
    %581 = vector.broadcast %578 : vector<1x1xf32> to vector<8x256xf32>
    %582 = arith.addf %580, %581 : vector<8x256xf32>
    %cst_242 = arith.constant 0.000000e+00 : f32
    %583 = vector.broadcast %cst_242 : f32 to vector<8x256xf32>
    %584 = arith.maximumf %582, %583 : vector<8x256xf32>
    %c4_i32_243 = arith.constant 4 : i32
    %585 = arith.muli %c1_i32_225, %c4_i32_243 : i32
    %c2_i32_244 = arith.constant 2 : i32
    %586 = arith.addi %585, %c2_i32_244 : i32
    %c0_245 = arith.constant 0 : index
    %587 = arith.index_cast %586 : i32 to index
    %c0_246 = arith.constant 0 : index
    %c0_247 = arith.constant 0 : index
    %588 = vector.load %arg4[%c0_245, %587, %c0_246, %c0_247] : memref<1x8x8x256xf32, #tpu.memory_space<vmem>>, vector<1x1x8x256xf32>
    %589 = vector.shape_cast %588 : vector<1x1x8x256xf32> to vector<8x256xf32>
    %590 = vector.shape_cast %584 : vector<8x256xf32> to vector<1x1x8x256xf32>
    tpu.vector_store %arg4[%c0_245, %587, %c0_246, %c0_247], %590 {strides = array<i32>} : memref<1x8x8x256xf32, #tpu.memory_space<vmem>>, vector<1x1x8x256xf32>,
    %c2_i32_248 = arith.constant 2 : i32
    %cst_249 = arith.constant 0.000000e+00 : f32
    %591 = vector.broadcast %cst_249 : f32 to vector<1x1xf32>
    %c0_i32_250 = arith.constant 0 : i32
    %c0_251 = arith.constant 0 : index
    %c3_252 = arith.constant 3 : index
    %592 = arith.index_cast %c0_i32_250 : i32 to index
    %c0_253 = arith.constant 0 : index
    %c0_254 = arith.constant 0 : index
    %593 = vector.load %arg2[%c0_251, %c3_252, %592, %c0_253, %c0_254] : memref<1x4x2x8x256xf32, #tpu.memory_space<vmem>>, vector<1x1x1x8x256xf32>
    %594 = vector.shape_cast %593 : vector<1x1x1x8x256xf32> to vector<8x256xf32>
    %c1_i32_255 = arith.constant 1 : i32
    %595 = tpu.dynamic_rotate %594 by %c1_i32_255 dim 0 : vector<8x256xf32>, i32 -> vector<8x256xf32>
    %596 = arith.mulf %595, %4 : vector<8x256xf32>
    %c7_i32_256 = arith.constant 7 : i32
    %597 = tpu.dynamic_rotate %594 by %c7_i32_256 dim 0 : vector<8x256xf32>, i32 -> vector<8x256xf32>
    %598 = arith.mulf %597, %8 : vector<8x256xf32>
    %c2_i32_257 = arith.constant 2 : i32
    %599 = arith.muli %arg1, %c2_i32_257 : i32
    %c48_i32 = arith.constant 48 : i32
    %600 = arith.addi %c48_i32, %599 : i32
    %601 = arith.addi %600, %c0_i32_250 : i32
    %c0_258 = arith.constant 0 : index
    %602 = arith.index_cast %601 : i32 to index
    %603 = memref.load %arg3[%c0_258, %602] : memref<6x64xf32, #tpu.memory_space<smem>>
    %604 = vector.broadcast %603 : f32 to vector<8x256xf32>
    %605 = arith.mulf %604, %596 : vector<8x256xf32>
    %c1_259 = arith.constant 1 : index
    %606 = arith.index_cast %601 : i32 to index
    %607 = memref.load %arg3[%c1_259, %606] : memref<6x64xf32, #tpu.memory_space<smem>>
    %608 = vector.broadcast %607 : f32 to vector<8x256xf32>
    %609 = arith.mulf %608, %594 : vector<8x256xf32>
    %610 = arith.addf %605, %609 : vector<8x256xf32>
    %c2_260 = arith.constant 2 : index
    %611 = arith.index_cast %601 : i32 to index
    %612 = memref.load %arg3[%c2_260, %611] : memref<6x64xf32, #tpu.memory_space<smem>>
    %613 = vector.broadcast %612 : f32 to vector<8x256xf32>
    %614 = arith.mulf %613, %598 : vector<8x256xf32>
    %615 = arith.addf %610, %614 : vector<8x256xf32>
    %c3_261 = arith.constant 3 : index
    %616 = arith.index_cast %601 : i32 to index
    %617 = memref.load %arg3[%c3_261, %616] : memref<6x64xf32, #tpu.memory_space<smem>>
    %618 = vector.broadcast %617 : f32 to vector<8x256xf32>
    %619 = arith.addf %615, %618 : vector<8x256xf32>
    %cst_262 = arith.constant dense<0.000000e+00> : vector<8xf32>
    %620 = vector.multi_reduction <add>, %619, %cst_262 [1] : vector<8x256xf32> to vector<8xf32>
    %621 = vector.shape_cast %620 : vector<8xf32> to vector<8x1xf32>
    %cst_263 = arith.constant dense<0.000000e+00> : vector<1xf32>
    %622 = vector.multi_reduction <add>, %621, %cst_263 [0] : vector<8x1xf32> to vector<1xf32>
    %623 = vector.shape_cast %622 : vector<1xf32> to vector<1x1xf32>
    %624 = arith.addf %591, %623 : vector<1x1xf32>
    %625 = arith.mulf %619, %619 : vector<8x256xf32>
    %cst_264 = arith.constant dense<0.000000e+00> : vector<8xf32>
    %626 = vector.multi_reduction <add>, %625, %cst_264 [1] : vector<8x256xf32> to vector<8xf32>
    %627 = vector.shape_cast %626 : vector<8xf32> to vector<8x1xf32>
    %cst_265 = arith.constant dense<0.000000e+00> : vector<1xf32>
    %628 = vector.multi_reduction <add>, %627, %cst_265 [0] : vector<8x1xf32> to vector<1xf32>
    %629 = vector.shape_cast %628 : vector<1xf32> to vector<1x1xf32>
    %630 = arith.addf %591, %629 : vector<1x1xf32>
    %c1_i32_266 = arith.constant 1 : i32
    %c0_267 = arith.constant 0 : index
    %c3_268 = arith.constant 3 : index
    %631 = arith.index_cast %c1_i32_266 : i32 to index
    %c0_269 = arith.constant 0 : index
    %c0_270 = arith.constant 0 : index
    %632 = vector.load %arg2[%c0_267, %c3_268, %631, %c0_269, %c0_270] : memref<1x4x2x8x256xf32, #tpu.memory_space<vmem>>, vector<1x1x1x8x256xf32>
    %633 = vector.shape_cast %632 : vector<1x1x1x8x256xf32> to vector<8x256xf32>
    %c1_i32_271 = arith.constant 1 : i32
    %634 = tpu.dynamic_rotate %633 by %c1_i32_271 dim 0 : vector<8x256xf32>, i32 -> vector<8x256xf32>
    %635 = arith.mulf %634, %4 : vector<8x256xf32>
    %c7_i32_272 = arith.constant 7 : i32
    %636 = tpu.dynamic_rotate %633 by %c7_i32_272 dim 0 : vector<8x256xf32>, i32 -> vector<8x256xf32>
    %637 = arith.mulf %636, %8 : vector<8x256xf32>
    %c2_i32_273 = arith.constant 2 : i32
    %638 = arith.muli %arg1, %c2_i32_273 : i32
    %c48_i32_274 = arith.constant 48 : i32
    %639 = arith.addi %c48_i32_274, %638 : i32
    %640 = arith.addi %639, %c1_i32_266 : i32
    %c0_275 = arith.constant 0 : index
    %641 = arith.index_cast %640 : i32 to index
    %642 = memref.load %arg3[%c0_275, %641] : memref<6x64xf32, #tpu.memory_space<smem>>
    %643 = vector.broadcast %642 : f32 to vector<8x256xf32>
    %644 = arith.mulf %643, %635 : vector<8x256xf32>
    %c1_276 = arith.constant 1 : index
    %645 = arith.index_cast %640 : i32 to index
    %646 = memref.load %arg3[%c1_276, %645] : memref<6x64xf32, #tpu.memory_space<smem>>
    %647 = vector.broadcast %646 : f32 to vector<8x256xf32>
    %648 = arith.mulf %647, %633 : vector<8x256xf32>
    %649 = arith.addf %644, %648 : vector<8x256xf32>
    %c2_277 = arith.constant 2 : index
    %650 = arith.index_cast %640 : i32 to index
    %651 = memref.load %arg3[%c2_277, %650] : memref<6x64xf32, #tpu.memory_space<smem>>
    %652 = vector.broadcast %651 : f32 to vector<8x256xf32>
    %653 = arith.mulf %652, %637 : vector<8x256xf32>
    %654 = arith.addf %649, %653 : vector<8x256xf32>
    %c3_278 = arith.constant 3 : index
    %655 = arith.index_cast %640 : i32 to index
    %656 = memref.load %arg3[%c3_278, %655] : memref<6x64xf32, #tpu.memory_space<smem>>
    %657 = vector.broadcast %656 : f32 to vector<8x256xf32>
    %658 = arith.addf %654, %657 : vector<8x256xf32>
    %cst_279 = arith.constant dense<0.000000e+00> : vector<8xf32>
    %659 = vector.multi_reduction <add>, %658, %cst_279 [1] : vector<8x256xf32> to vector<8xf32>
    %660 = vector.shape_cast %659 : vector<8xf32> to vector<8x1xf32>
    %cst_280 = arith.constant dense<0.000000e+00> : vector<1xf32>
    %661 = vector.multi_reduction <add>, %660, %cst_280 [0] : vector<8x1xf32> to vector<1xf32>
    %662 = vector.shape_cast %661 : vector<1xf32> to vector<1x1xf32>
    %663 = arith.addf %624, %662 : vector<1x1xf32>
    %664 = arith.mulf %658, %658 : vector<8x256xf32>
    %cst_281 = arith.constant dense<0.000000e+00> : vector<8xf32>
    %665 = vector.multi_reduction <add>, %664, %cst_281 [1] : vector<8x256xf32> to vector<8xf32>
    %666 = vector.shape_cast %665 : vector<8xf32> to vector<8x1xf32>
    %cst_282 = arith.constant dense<0.000000e+00> : vector<1xf32>
    %667 = vector.multi_reduction <add>, %666, %cst_282 [0] : vector<8x1xf32> to vector<1xf32>
    %668 = vector.shape_cast %667 : vector<1xf32> to vector<1x1xf32>
    %669 = arith.addf %630, %668 : vector<1x1xf32>
    %c2_i32_283 = arith.constant 2 : i32
    %cst_284 = arith.constant 2.44140625E-4 : f32
    %670 = vector.broadcast %cst_284 : f32 to vector<1x1xf32>
    %671 = arith.mulf %663, %670 : vector<1x1xf32>
    %cst_285 = arith.constant 2.44140625E-4 : f32
    %672 = vector.broadcast %cst_285 : f32 to vector<1x1xf32>
    %673 = arith.mulf %669, %672 : vector<1x1xf32>
    %674 = arith.mulf %671, %671 : vector<1x1xf32>
    %675 = arith.subf %673, %674 : vector<1x1xf32>
    %cst_286 = arith.constant 0.000000e+00 : f32
    %676 = vector.broadcast %cst_286 : f32 to vector<1x1xf32>
    %677 = arith.maximumf %675, %676 : vector<1x1xf32>
    %cst_287 = arith.constant 9.99999974E-6 : f32
    %678 = vector.broadcast %cst_287 : f32 to vector<1x1xf32>
    %679 = arith.addf %677, %678 : vector<1x1xf32>
    %680 = math.rsqrt %679 : vector<1x1xf32>
    %c0_i32_288 = arith.constant 0 : i32
    %c0_289 = arith.constant 0 : index
    %c3_290 = arith.constant 3 : index
    %681 = arith.index_cast %c0_i32_288 : i32 to index
    %c0_291 = arith.constant 0 : index
    %c0_292 = arith.constant 0 : index
    %682 = vector.load %arg2[%c0_289, %c3_290, %681, %c0_291, %c0_292] : memref<1x4x2x8x256xf32, #tpu.memory_space<vmem>>, vector<1x1x1x8x256xf32>
    %683 = vector.shape_cast %682 : vector<1x1x1x8x256xf32> to vector<8x256xf32>
    %c1_i32_293 = arith.constant 1 : i32
    %684 = tpu.dynamic_rotate %683 by %c1_i32_293 dim 0 : vector<8x256xf32>, i32 -> vector<8x256xf32>
    %685 = arith.mulf %684, %4 : vector<8x256xf32>
    %c7_i32_294 = arith.constant 7 : i32
    %686 = tpu.dynamic_rotate %683 by %c7_i32_294 dim 0 : vector<8x256xf32>, i32 -> vector<8x256xf32>
    %687 = arith.mulf %686, %8 : vector<8x256xf32>
    %c2_i32_295 = arith.constant 2 : i32
    %688 = arith.muli %arg1, %c2_i32_295 : i32
    %c48_i32_296 = arith.constant 48 : i32
    %689 = arith.addi %c48_i32_296, %688 : i32
    %690 = arith.addi %689, %c0_i32_288 : i32
    %c0_297 = arith.constant 0 : index
    %691 = arith.index_cast %690 : i32 to index
    %692 = memref.load %arg3[%c0_297, %691] : memref<6x64xf32, #tpu.memory_space<smem>>
    %693 = vector.broadcast %692 : f32 to vector<8x256xf32>
    %694 = arith.mulf %693, %685 : vector<8x256xf32>
    %c1_298 = arith.constant 1 : index
    %695 = arith.index_cast %690 : i32 to index
    %696 = memref.load %arg3[%c1_298, %695] : memref<6x64xf32, #tpu.memory_space<smem>>
    %697 = vector.broadcast %696 : f32 to vector<8x256xf32>
    %698 = arith.mulf %697, %683 : vector<8x256xf32>
    %699 = arith.addf %694, %698 : vector<8x256xf32>
    %c2_299 = arith.constant 2 : index
    %700 = arith.index_cast %690 : i32 to index
    %701 = memref.load %arg3[%c2_299, %700] : memref<6x64xf32, #tpu.memory_space<smem>>
    %702 = vector.broadcast %701 : f32 to vector<8x256xf32>
    %703 = arith.mulf %702, %687 : vector<8x256xf32>
    %704 = arith.addf %699, %703 : vector<8x256xf32>
    %c3_300 = arith.constant 3 : index
    %705 = arith.index_cast %690 : i32 to index
    %706 = memref.load %arg3[%c3_300, %705] : memref<6x64xf32, #tpu.memory_space<smem>>
    %707 = vector.broadcast %706 : f32 to vector<8x256xf32>
    %708 = arith.addf %704, %707 : vector<8x256xf32>
    %c2_i32_301 = arith.constant 2 : i32
    %709 = arith.muli %arg1, %c2_i32_301 : i32
    %c48_i32_302 = arith.constant 48 : i32
    %710 = arith.addi %c48_i32_302, %709 : i32
    %711 = arith.addi %710, %c0_i32_288 : i32
    %c4_303 = arith.constant 4 : index
    %712 = arith.index_cast %711 : i32 to index
    %713 = memref.load %arg3[%c4_303, %712] : memref<6x64xf32, #tpu.memory_space<smem>>
    %714 = vector.broadcast %713 : f32 to vector<1x1xf32>
    %715 = arith.mulf %680, %714 : vector<1x1xf32>
    %c5_304 = arith.constant 5 : index
    %716 = arith.index_cast %711 : i32 to index
    %717 = memref.load %arg3[%c5_304, %716] : memref<6x64xf32, #tpu.memory_space<smem>>
    %718 = arith.mulf %671, %715 : vector<1x1xf32>
    %719 = vector.broadcast %717 : f32 to vector<1x1xf32>
    %720 = arith.subf %719, %718 : vector<1x1xf32>
    %721 = vector.broadcast %715 : vector<1x1xf32> to vector<8x256xf32>
    %722 = arith.mulf %708, %721 : vector<8x256xf32>
    %723 = vector.broadcast %720 : vector<1x1xf32> to vector<8x256xf32>
    %724 = arith.addf %722, %723 : vector<8x256xf32>
    %cst_305 = arith.constant 0.000000e+00 : f32
    %725 = vector.broadcast %cst_305 : f32 to vector<8x256xf32>
    %726 = arith.maximumf %724, %725 : vector<8x256xf32>
    %c4_i32_306 = arith.constant 4 : i32
    %727 = arith.muli %c0_i32_288, %c4_i32_306 : i32
    %c3_i32 = arith.constant 3 : i32
    %728 = arith.addi %727, %c3_i32 : i32
    %c0_307 = arith.constant 0 : index
    %729 = arith.index_cast %728 : i32 to index
    %c0_308 = arith.constant 0 : index
    %c0_309 = arith.constant 0 : index
    %730 = vector.load %arg4[%c0_307, %729, %c0_308, %c0_309] : memref<1x8x8x256xf32, #tpu.memory_space<vmem>>, vector<1x1x8x256xf32>
    %731 = vector.shape_cast %730 : vector<1x1x8x256xf32> to vector<8x256xf32>
    %732 = vector.shape_cast %726 : vector<8x256xf32> to vector<1x1x8x256xf32>
    tpu.vector_store %arg4[%c0_307, %729, %c0_308, %c0_309], %732 {strides = array<i32>} : memref<1x8x8x256xf32, #tpu.memory_space<vmem>>, vector<1x1x8x256xf32>,
    %c1_i32_310 = arith.constant 1 : i32
    %c0_311 = arith.constant 0 : index
    %c3_312 = arith.constant 3 : index
    %733 = arith.index_cast %c1_i32_310 : i32 to index
    %c0_313 = arith.constant 0 : index
    %c0_314 = arith.constant 0 : index
    %734 = vector.load %arg2[%c0_311, %c3_312, %733, %c0_313, %c0_314] : memref<1x4x2x8x256xf32, #tpu.memory_space<vmem>>, vector<1x1x1x8x256xf32>
    %735 = vector.shape_cast %734 : vector<1x1x1x8x256xf32> to vector<8x256xf32>
    %c1_i32_315 = arith.constant 1 : i32
    %736 = tpu.dynamic_rotate %735 by %c1_i32_315 dim 0 : vector<8x256xf32>, i32 -> vector<8x256xf32>
    %737 = arith.mulf %736, %4 : vector<8x256xf32>
    %c7_i32_316 = arith.constant 7 : i32
    %738 = tpu.dynamic_rotate %735 by %c7_i32_316 dim 0 : vector<8x256xf32>, i32 -> vector<8x256xf32>
    %739 = arith.mulf %738, %8 : vector<8x256xf32>
    %c2_i32_317 = arith.constant 2 : i32
    %740 = arith.muli %arg1, %c2_i32_317 : i32
    %c48_i32_318 = arith.constant 48 : i32
    %741 = arith.addi %c48_i32_318, %740 : i32
    %742 = arith.addi %741, %c1_i32_310 : i32
    %c0_319 = arith.constant 0 : index
    %743 = arith.index_cast %742 : i32 to index
    %744 = memref.load %arg3[%c0_319, %743] : memref<6x64xf32, #tpu.memory_space<smem>>
    %745 = vector.broadcast %744 : f32 to vector<8x256xf32>
    %746 = arith.mulf %745, %737 : vector<8x256xf32>
    %c1_320 = arith.constant 1 : index
    %747 = arith.index_cast %742 : i32 to index
    %748 = memref.load %arg3[%c1_320, %747] : memref<6x64xf32, #tpu.memory_space<smem>>
    %749 = vector.broadcast %748 : f32 to vector<8x256xf32>
    %750 = arith.mulf %749, %735 : vector<8x256xf32>
    %751 = arith.addf %746, %750 : vector<8x256xf32>
    %c2_321 = arith.constant 2 : index
    %752 = arith.index_cast %742 : i32 to index
    %753 = memref.load %arg3[%c2_321, %752] : memref<6x64xf32, #tpu.memory_space<smem>>
    %754 = vector.broadcast %753 : f32 to vector<8x256xf32>
    %755 = arith.mulf %754, %739 : vector<8x256xf32>
    %756 = arith.addf %751, %755 : vector<8x256xf32>
    %c3_322 = arith.constant 3 : index
    %757 = arith.index_cast %742 : i32 to index
    %758 = memref.load %arg3[%c3_322, %757] : memref<6x64xf32, #tpu.memory_space<smem>>
    %759 = vector.broadcast %758 : f32 to vector<8x256xf32>
    %760 = arith.addf %756, %759 : vector<8x256xf32>
    %c2_i32_323 = arith.constant 2 : i32
    %761 = arith.muli %arg1, %c2_i32_323 : i32
    %c48_i32_324 = arith.constant 48 : i32
    %762 = arith.addi %c48_i32_324, %761 : i32
    %763 = arith.addi %762, %c1_i32_310 : i32
    %c4_325 = arith.constant 4 : index
    %764 = arith.index_cast %763 : i32 to index
    %765 = memref.load %arg3[%c4_325, %764] : memref<6x64xf32, #tpu.memory_space<smem>>
    %766 = vector.broadcast %765 : f32 to vector<1x1xf32>
    %767 = arith.mulf %680, %766 : vector<1x1xf32>
    %c5_326 = arith.constant 5 : index
    %768 = arith.index_cast %763 : i32 to index
    %769 = memref.load %arg3[%c5_326, %768] : memref<6x64xf32, #tpu.memory_space<smem>>
    %770 = arith.mulf %671, %767 : vector<1x1xf32>
    %771 = vector.broadcast %769 : f32 to vector<1x1xf32>
    %772 = arith.subf %771, %770 : vector<1x1xf32>
    %773 = vector.broadcast %767 : vector<1x1xf32> to vector<8x256xf32>
    %774 = arith.mulf %760, %773 : vector<8x256xf32>
    %775 = vector.broadcast %772 : vector<1x1xf32> to vector<8x256xf32>
    %776 = arith.addf %774, %775 : vector<8x256xf32>
    %cst_327 = arith.constant 0.000000e+00 : f32
    %777 = vector.broadcast %cst_327 : f32 to vector<8x256xf32>
    %778 = arith.maximumf %776, %777 : vector<8x256xf32>
    %c4_i32_328 = arith.constant 4 : i32
    %779 = arith.muli %c1_i32_310, %c4_i32_328 : i32
    %c3_i32_329 = arith.constant 3 : i32
    %780 = arith.addi %779, %c3_i32_329 : i32
    %c0_330 = arith.constant 0 : index
    %781 = arith.index_cast %780 : i32 to index
    %c0_331 = arith.constant 0 : index
    %c0_332 = arith.constant 0 : index
    %782 = vector.load %arg4[%c0_330, %781, %c0_331, %c0_332] : memref<1x8x8x256xf32, #tpu.memory_space<vmem>>, vector<1x1x8x256xf32>
    %783 = vector.shape_cast %782 : vector<1x1x8x256xf32> to vector<8x256xf32>
    %784 = vector.shape_cast %778 : vector<8x256xf32> to vector<1x1x8x256xf32>
    tpu.vector_store %arg4[%c0_330, %781, %c0_331, %c0_332], %784 {strides = array<i32>} : memref<1x8x8x256xf32, #tpu.memory_space<vmem>>, vector<1x1x8x256xf32>,
    %c2_i32_333 = arith.constant 2 : i32
    return
  }
  func.func @transform_0(%arg0: i32, %arg1: i32) -> (i32, i32, i32, i32, i32) {
    %c0_i32 = arith.constant 0 : i32
    %c0_i32_0 = arith.constant 0 : i32
    %c0_i32_1 = arith.constant 0 : i32
    %c0_i32_2 = arith.constant 0 : i32
    return %arg0, %c0_i32, %arg1, %c0_i32_0, %c0_i32_1 : i32, i32, i32, i32, i32
  }
  func.func @transform_1(%arg0: i32, %arg1: i32) -> (i32, i32) {
    %c0_i32 = arith.constant 0 : i32
    %c0_i32_0 = arith.constant 0 : i32
    %c0_i32_1 = arith.constant 0 : i32
    return %c0_i32, %c0_i32_0 : i32, i32
  }
  func.func @transform_2(%arg0: i32, %arg1: i32) -> (i32, i32, i32, i32) {
    %c0_i32 = arith.constant 0 : i32
    %c0_i32_0 = arith.constant 0 : i32
    %c0_i32_1 = arith.constant 0 : i32
    return %arg0, %arg1, %c0_i32, %c0_i32_0 : i32, i32, i32, i32
  }
}

</mosaic_0001>

<llo_original>
// kernel: tpu_custom_call.1
$region0: #{tpu_custom_call.1}
  #allocation0 [shape = 'u32[]', space=smem, size = 0x4, offset = 0x4, fixed_abs, tag = 'smem constant byte address 0x4 - core index']
  #allocation1 [shape = 'u32[144,128]{1,0:T(1,128)}', space=vmem, size = 0x12000, scoped, tag = 'internal scratch']
  #allocation8 [shape = 's32[]', space=sflag, size = 0x4, offset = 0, fixed_abs, tag = 'sflag constant byte address 0x0 - dummy sync flag']
  %s0 = inlined_call_operand.hbm [shape: f32[2,4,16,8,256], index: 0, kind: input, shape index: {}]
  %s1 = inlined_call_operand.hbm [shape: f32[6,64], index: 1, kind: input, shape index: {}]
  %s2 = inlined_call_operand.hbm [shape: f32[2,64,8,256], index: 2, kind: output, shape index: {}]
  %s3 = sld [smem:[#allocation0]]
  $region49: #{tpu_custom_call.1} parent=0
    _
  %s5 = ssub.s32 1, %s3
  %s6 = scalar_select 0, %s5, %s3
  $region1: #{tpu_custom_call.1} parent=0
    #allocation2 [shape = 'u8[131072]{0}', space=vmem, size = 0x20000, scoped, tag = 'input window, operand 0']
    #allocation3 [shape = 's32[2]{0}', space=sflag, size = 0x8, scoped, tag = 'scoped memory for tpu_custom_call.1']
    #allocation4 [shape = 's32[2]{0}', space=sflag, size = 0x8, scoped, tag = 'scoped memory for tpu_custom_call.1']
    #allocation5 [shape = 's32[2]{0}', space=sflag, size = 0x8, scoped, tag = 'scoped memory for tpu_custom_call.1']
    #allocation6 [shape = 'u8[4096]{0}', space=smem, size = 0x1000, scoped, tag = 'input window, operand 1, single buffered']
    #allocation7 [shape = 'u8[131072]{0}', space=vmem, size = 0x20000, scoped, tag = 'output window, operand 0']
    %7 = vsyncpa [#allocation3], 0
    %s8 = scalar_lea.sflag [#allocation3], 1
    %9 = vsyncpa %s8, 0
    %10 = vsyncpa [#allocation5], 0
    %11 = vsyncpa [#allocation4], 0
    %s12 = scalar_lea.sflag [#allocation4], 1
    %13 = vsyncpa %s12, 0
    loop: start=0, step=1, limit=18
    $region2: #{tpu_custom_call.1} parent=1 // loop_pre_header
      _
    $region3: #{tpu_custom_call.1} parent=1 // loop_header
      %s15 = sphi 0, %s19
      %p16 = scmp.ge.s32.totalorder %s15, 18
      %s22 = sphi 0, %s34
      %s23 = sphi 0, %s30
      %s24 = sphi 0, %s22
      %s25 = sphi 0, %s23
      %s26 = sphi 0, %s24
      %s27 = sphi 0, %s25
      %s39 = sphi 0, %s41
      %s42 = sphi 0, %s39
      %s43 = sphi 0, %s42
      %s59 = sphi 0, %s43
      %s63 = sphi 0, %s63
      %s65 = sphi 0, %s63
      %s66 = sphi 0, %s65
      %s80 = sphi 0, %s66
      %s88 = sphi 0, %s90
      %s91 = sphi 0, %s88
      %s92 = sphi 0, %s91
      %s108 = sphi 0, %s92
    $region4: #{tpu_custom_call.1} parent=1 // loop_header_branch
      %18 = sbr.rel (%p16) target = $region8
    $region5: #{tpu_custom_call.1} parent=1 // loop_body
      %s20 = ssub.s32 %s15, 1
      %s21 = ssub.s32 %s15, 2
      %s28 = sadd.s32 1, %s23
      %p29 = scmp.ge.s32.totalorder %s28, 8
      %s30 = scalar_select %p29, 0, %s28
      %s31 = sadd.s32 1, %s22
      %s32 = scalar_select %p29, %s31, %s22
      %p33 = scmp.ge.s32.totalorder %s32, 2
      %s34 = scalar_select %p33, 0, %s32
      %s35 = ssub.s32 %s22, %s34
      %s36 = ssub.s32 %s23, %s30
      %s37 = sor.u32 %s35, %s36
      %p38 = scmp.eq.s32.totalorder %s37, 0
      %s40 = sadd.s32 %s39, 1
      %s41 = scalar_select %p38, %s39, %s40
      %p44 = pneg %p38
      %p45 = scmp.eq.s32.totalorder %s15, 15
      %p46 = por %p44, %p45
      %p47 = scmp.ne.s32.totalorder %s39, %s42
      %p48 = scmp.eq.s32.totalorder %s15, 0
      %p49 = por %p47, %p48
      %p50 = scmp.ne.s32.totalorder %s39, %s42
      %p51 = scmp.eq.s32.totalorder %s20, 15
      %p52 = por %p50, %p51
      %p53 = scmp.ne.s32.totalorder %s42, %s43
      %p54 = scmp.eq.s32.totalorder %s20, 0
      %p55 = por %p53, %p54
      %p56 = scmp.ne.s32.totalorder %s42, %s43
      %p57 = scmp.eq.s32.totalorder %s21, 15
      %p58 = por %p56, %p57
      %p60 = scmp.ne.s32.totalorder %s43, %s59
      %p61 = scmp.eq.s32.totalorder %s21, 0
      %p62 = por %p60, %p61
      %s64 = sadd.s32 %s63, 1
      %p67 = scmp.eq.s32.totalorder %s15, 15
      %p68 = scmp.ne.s32.totalorder %s63, %s65
      %p69 = scmp.eq.s32.totalorder %s15, 0
      %p70 = por %p68, %p69
      %p71 = scmp.ne.s32.totalorder %s63, %s65
      %p72 = scmp.eq.s32.totalorder %s20, 15
      %p73 = por %p71, %p72
      %p74 = scmp.ne.s32.totalorder %s65, %s66
      %p75 = scmp.eq.s32.totalorder %s20, 0
      %p76 = por %p74, %p75
      %p77 = scmp.ne.s32.totalorder %s65, %s66
      %p78 = scmp.eq.s32.totalorder %s21, 15
      %p79 = por %p77, %p78
      %p81 = scmp.ne.s32.totalorder %s66, %s80
      %p82 = scmp.eq.s32.totalorder %s21, 0
      %p83 = por %p81, %p82
      %s84 = ssub.s32 %s22, %s34
      %s85 = ssub.s32 %s23, %s30
      %s86 = sor.u32 %s84, %s85
      %p87 = scmp.eq.s32.totalorder %s86, 0
      %s89 = sadd.s32 %s88, 1
      %s90 = scalar_select %p87, %s88, %s89
      %p93 = pneg %p87
      %p94 = scmp.eq.s32.totalorder %s15, 15
      %p95 = por %p93, %p94
      %p96 = scmp.ne.s32.totalorder %s88, %s91
      %p97 = scmp.eq.s32.totalorder %s15, 0
      %p98 = por %p96, %p97
      %p99 = scmp.ne.s32.totalorder %s88, %s91
      %p100 = scmp.eq.s32.totalorder %s20, 15
      %p101 = por %p99, %p100
      %p102 = scmp.ne.s32.totalorder %s91, %s92
      %p103 = scmp.eq.s32.totalorder %s20, 0
      %p104 = por %p102, %p103
      %p105 = scmp.ne.s32.totalorder %s91, %s92
      %p106 = scmp.eq.s32.totalorder %s21, 15
      %p107 = por %p105, %p106
      %p109 = scmp.ne.s32.totalorder %s92, %s108
      %p110 = scmp.eq.s32.totalorder %s21, 0
      %p111 = por %p109, %p110
      %p112 = scmp.le.s32.totalorder 1, %s15
      %p113 = scmp.lt.s32.totalorder %s15, 17
      %p114 = pnand %p112, %p113
      %p115 = pneg %p114
      // Predicated region
      $region9: #{tpu_custom_call.1} parent=5 // pred_check
        _
      $region10: #{tpu_custom_call.1} parent=5 // pred_check_branch
        %117 = sbr.rel (%p114) target = $region12
      $region11: #{tpu_custom_call.1} parent=5 // pred_region
        %s118 = ssub.s32 %s15, 1
        // Predicated region
        $region13: #{tpu_custom_call.1} parent=11 // pred_check
          %p119 = pneg %p76
        $region14: #{tpu_custom_call.1} parent=11 // pred_check_branch
          %121 = sbr.rel (%p119) target = $region16
        $region15: #{tpu_custom_call.1} parent=11 // pred_region
          %s123 = ssub.s32 128, 128
          %124 = vsyncadd [#allocation5], %s123
          %127 = dma.hbm_to_smem %s1, 128, [#allocation6], [#allocation5]
        $region16: #{tpu_custom_call.1} parent=11 // pred_fallthru
          _
      $region12: #{tpu_custom_call.1} parent=5 // pred_fallthru
        _
      %p128 = scmp.lt.s32.totalorder %s15, 16
      // Predicated region
      $region17: #{tpu_custom_call.1} parent=5 // pred_check
        %p129 = pneg %p128
      $region18: #{tpu_custom_call.1} parent=5 // pred_check_branch
        %131 = sbr.rel (%p129) target = $region20
      $region19: #{tpu_custom_call.1} parent=5 // pred_region
        // Predicated region
        $region21: #{tpu_custom_call.1} parent=19 // pred_check
          %p132 = pneg %p49
        $region22: #{tpu_custom_call.1} parent=19 // pred_check_branch
          %134 = sbr.rel (%p132) target = $region24
        $region23: #{tpu_custom_call.1} parent=19 // pred_region
          #allocation9 [shape = 'u32[6]{0}', space=smem, size = 0x18, scoped, tag = 'DMA stride descriptor']
          %s135 = sand.u32 %s39, 1
          %s136 = scalar_lea.sflag [#allocation3], %s135
          %s137 = sand.u32 %s39, 1
          %s138 = smul.addr %s137, 128
          %s139 = scalar_lea.vmem [#allocation2], %s138
          %s140 = smul.u32 2, %s23
          %s142 = ssub.s32 2048, 2048
          %143 = vsyncadd %s136, %s142
          %s144 = smul.addr %s140, 2
          %s145 = smul.addr %s22, 128
          %s146 = sadd.s32 %s144, %s145
          %s147 = smul.addr %s146, 128
          %s148 = scalar_lea.hbm %s0, %s147
          %s150 = sshll.u32 1, 14
          %s151 = sxor.u32 4294967295, %s150
          %s153 = sld [smem:[#allocation0]]
          %s154 = sadd.s32 2, %s153
          %s156 = sshll.u32 7, 26
          %s157 = sxor.u32 4294967295, %s156
          %s158 = sand.u32 0, %s157
          %s159 = sshll.u32 %s154, 26
          %s160 = sor.u32 %s158, %s159
          %s161 = sshll.u32 %s139, 4
          %s162 = int_to_ptr.vmem [resolvable:$true] %s161
          %168 = sst [smem:[#allocation9]] 4096
          %s169 = scalar_lea.smem [#allocation9], 1
          %170 = sst [smem:[%s169]] 512
          %s171 = scalar_lea.smem [#allocation9], 2
          %172 = sst [smem:[%s171]] 2
          %s173 = scalar_lea.smem [#allocation9], 3
          %174 = sst [smem:[%s173]] 256
          %s175 = scalar_lea.smem [#allocation9], 4
          %176 = sst [smem:[%s175]] 256
          %s177 = scalar_lea.smem [#allocation9], 5
          %178 = sst [smem:[%s177]] 16
          %180 = dma.general %s148, 2048, %s162, %s136, [#allocation8], [#allocation9], %s160, 0
        $region24: #{tpu_custom_call.1} parent=19 // pred_fallthru
          _
      $region20: #{tpu_custom_call.1} parent=5 // pred_fallthru
        _
      %p181 = scmp.le.s32.totalorder 1, %s15
      %p182 = scmp.lt.s32.totalorder %s15, 17
      %p183 = pnand %p181, %p182
      %p184 = pneg %p183
      // Predicated region
      $region25: #{tpu_custom_call.1} parent=5 // pred_check
        _
      $region26: #{tpu_custom_call.1} parent=5 // pred_check_branch
        %186 = sbr.rel (%p183) target = $region28
      $region27: #{tpu_custom_call.1} parent=5 // pred_region
        %s187 = ssub.s32 %s15, 1
        %s188 = sand.u32 %s42, 1
        %s189 = scalar_lea.sflag [#allocation3], %s188
        %s190 = sand.u32 %s42, 1
        %s191 = smul.addr %s190, 128
        %s192 = scalar_lea.vmem [#allocation2], %s191
        // Predicated region
        $region29: #{tpu_custom_call.1} parent=27 // pred_check
          %p193 = pneg %p55
        $region30: #{tpu_custom_call.1} parent=27 // pred_check_branch
          %195 = sbr.rel (%p193) target = $region32
        $region31: #{tpu_custom_call.1} parent=27 // pred_region
          %196 = dma.done %s189, 2048
        $region32: #{tpu_custom_call.1} parent=27 // pred_fallthru
          _
        // Predicated region
        $region33: #{tpu_custom_call.1} parent=27 // pred_check
          %p197 = pneg %p76
        $region34: #{tpu_custom_call.1} parent=27 // pred_check_branch
          %199 = sbr.rel (%p197) target = $region36
        $region35: #{tpu_custom_call.1} parent=27 // pred_region
          %200 = dma.done [#allocation5], 128
        $region36: #{tpu_custom_call.1} parent=27 // pred_fallthru
          _
        %201 = sfence
        %s202 = sand.u32 %s42, 1
        %s203 = scalar_lea.sflag [#allocation3], %s202
        %s204 = sand.u32 %s42, 1
        %s205 = smul.addr %s204, 128
        %s206 = scalar_lea.vmem [#allocation2], %s205
        %p207 = pneg %p55
        %p208 = pneg %p52
        %p209 = pneg %p76
        %p210 = pneg %p73
        %p211 = pneg %p104
        %p212 = pneg %p101
        %s213 = sand.u32 %s91, 1
        %s214 = scalar_lea.sflag [#allocation4], %s213
        %s215 = sand.u32 %s91, 1
        %s216 = smul.addr %s215, 128
        %s217 = scalar_lea.vmem [#allocation7], %s216
        %s218 = smul.u32 2, %s25
        %s219 = smul.u32 8, %s25
        %v220 = vlaneseq
        %v221 = vshrl.u32 %v220, 7
        %vm222 = vcmp.gt.s32.totalorder %v221, 0
        %v223 = vsel %vm222, 1, 0
        %v224 = vcvt.s32.f32 %v223
        %vm225 = vcmp.lt.s32.totalorder %v221, 7
        %v226 = vsel %vm225, 1, 0
        %v227 = vcvt.s32.f32 %v226
        %v228 = vld [vmem:[%s192] sm:$0xff]
        %v229 = vld [vmem:[%s192 + $0x8] sm:$0xff]
        %v230 = vrot.slane %v228, 7
        %v231 = vrot.slane %v229, 7
        %v232 = vmul.f32 %v230, %v224
        %v233 = vmul.f32 %v231, %v224
        %v234 = vrot.slane %v228, 1
        %v235 = vrot.slane %v229, 1
        %v236 = vmul.f32 %v234, %v227
        %v237 = vmul.f32 %v235, %v227
        %s238 = smul.u32 %s25, 2
        %s239 = sld [smem:[#allocation6 + %s238]]
        %v240 = vstv %s239
        %v241 = vmul.f32 %v240, %v232
        %v242 = vmul.f32 %v240, %v233
        %s243 = sshra.s32 %s238, 7
        %s244 = sand.u32 %s238, 127
        %s245 = sadd.s32 %s243, 1
        %s246 = smul.u32 %s245, 128
        %s247 = sshra.s32 %s238, 7
        %s248 = sand.u32 %s238, 127
        %s249 = sadd.s32 %s246, %s248
        %s250 = sld [smem:[#allocation6 + %s249]]
        %v251 = vstv %s250
        %v252 = vmul.f32 %v251, %v228
        %v253 = vmul.f32 %v251, %v229
        %v254 = vadd.f32 %v241, %v252
        %v255 = vadd.f32 %v242, %v253
        %s256 = sadd.s32 %s243, 2
        %s257 = smul.u32 %s256, 128
        %s258 = sadd.s32 %s257, %s248
        %s259 = sld [smem:[#allocation6 + %s258]]
        %v260 = vstv %s259
        %v261 = vmul.f32 %v260, %v236
        %v262 = vmul.f32 %v260, %v237
        %v263 = vadd.f32 %v254, %v261
        %v264 = vadd.f32 %v255, %v262
        %s265 = sadd.s32 %s243, 3
        %s266 = smul.u32 %s265, 128
        %s267 = sadd.s32 %s266, %s248
        %s268 = sld [smem:[#allocation6 + %s267]]
        %v269 = vstv %s268
        %v270 = vadd.f32 %v263, %v269
        %v271 = vadd.f32 %v264, %v269
        %v272 = vadd.f32 %v270, %v271
        %273 = vadd.xlane.f32.xlu0 %v272
        %v274 = vpop.xlane.xlu0 %273
        %v275 = vrot.slane %v274, 4
        %v276 = vadd.f32 %v274, %v275
        %v277 = vrot.slane %v276, 2
        %v278 = vadd.f32 %v276, %v277
        %v279 = vrot.slane %v278, 1
        %v280 = vadd.f32 %v278, %v279
        %v281 = vadd.f32 %v280, 0.0
        %v282 = vmul.f32 %v270, %v270
        %v283 = vmul.f32 %v271, %v271
        %v284 = vadd.f32 %v282, %v283
        %285 = vadd.xlane.f32.xlu0 %v284
        %v286 = vpop.xlane.xlu0 %285
        %v287 = vrot.slane %v286, 4
        %v288 = vadd.f32 %v286, %v287
        %v289 = vrot.slane %v288, 2
        %v290 = vadd.f32 %v288, %v289
        %v291 = vrot.slane %v290, 1
        %v292 = vadd.f32 %v290, %v291
        %v293 = vadd.f32 %v292, 0.0
        %s294 = scalar_lea.vmem %s192, 16 [#allocation2]
        %v295 = vld [vmem:[%s294] sm:$0xff]
        %v296 = vld [vmem:[%s294 + $0x8] sm:$0xff]
        %v297 = vrot.slane %v295, 7
        %v298 = vrot.slane %v296, 7
        %v299 = vmul.f32 %v297, %v224
        %v300 = vmul.f32 %v298, %v224
        %v301 = vrot.slane %v295, 1
        %v302 = vrot.slane %v296, 1
        %v303 = vmul.f32 %v301, %v227
        %v304 = vmul.f32 %v302, %v227
        %s305 = sadd.s32 %s238, 1
        %s306 = sld [smem:[#allocation6 + %s305]]
        %v307 = vstv %s306
        %v308 = vmul.f32 %v307, %v299
        %v309 = vmul.f32 %v307, %v300
        %s310 = sshra.s32 %s305, 7
        %s311 = sand.u32 %s305, 127
        %s312 = sadd.s32 %s310, 1
        %s313 = smul.u32 %s312, 128
        %s314 = sshra.s32 %s305, 7
        %s315 = sand.u32 %s305, 127
        %s316 = sadd.s32 %s313, %s315
        %s317 = sld [smem:[#allocation6 + %s316]]
        %v318 = vstv %s317
        %v319 = vmul.f32 %v318, %v295
        %v320 = vmul.f32 %v318, %v296
        %v321 = vadd.f32 %v308, %v319
        %v322 = vadd.f32 %v309, %v320
        %s323 = sadd.s32 %s310, 2
        %s324 = smul.u32 %s323, 128
        %s325 = sadd.s32 %s324, %s315
        %s326 = sld [smem:[#allocation6 + %s325]]
        %v327 = vstv %s326
        %v328 = vmul.f32 %v327, %v303
        %v329 = vmul.f32 %v327, %v304
        %v330 = vadd.f32 %v321, %v328
        %v331 = vadd.f32 %v322, %v329
        %s332 = sadd.s32 %s310, 3
        %s333 = smul.u32 %s332, 128
        %s334 = sadd.s32 %s333, %s315
        %s335 = sld [smem:[#allocation6 + %s334]]
        %v336 = vstv %s335
        %v337 = vadd.f32 %v330, %v336
        %v338 = vadd.f32 %v331, %v336
        %v339 = vadd.f32 %v337, %v338
        %340 = vadd.xlane.f32.xlu0 %v339
        %v341 = vpop.xlane.xlu0 %340
        %v342 = vrot.slane %v341, 4
        %v343 = vadd.f32 %v341, %v342
        %v344 = vrot.slane %v343, 2
        %v345 = vadd.f32 %v343, %v344
        %v346 = vrot.slane %v345, 1
        %v347 = vadd.f32 %v345, %v346
        %v348 = vadd.f32 %v281, %v347
        %v349 = vmul.f32 %v337, %v337
        %v350 = vmul.f32 %v338, %v338
        %v351 = vadd.f32 %v349, %v350
        %352 = vadd.xlane.f32.xlu0 %v351
        %v353 = vpop.xlane.xlu0 %352
        %v354 = vrot.slane %v353, 4
        %v355 = vadd.f32 %v353, %v354
        %v356 = vrot.slane %v355, 2
        %v357 = vadd.f32 %v355, %v356
        %v358 = vrot.slane %v357, 1
        %v359 = vadd.f32 %v357, %v358
        %v360 = vadd.f32 %v293, %v359
        %v361 = vmul.f32 %v348, 0.00024414063
        %v362 = vmul.f32 %v360, 0.00024414063
        %v363 = vmul.f32 %v361, %v361
        %v364 = vsub.f32 %v362, %v363
        %v365 = vmax.f32 %v364, 0.0
        %v366 = vadd.f32 %v365, 1e-05
        %v367 = vrsqrt.pop %v366
        %s368 = sadd.s32 %s243, 4
        %s369 = smul.u32 %s368, 128
        %s370 = sadd.s32 %s369, %s248
        %s371 = sld [smem:[#allocation6 + %s370]]
        %v372 = vstv %s371
        %v373 = vmul.f32 %v367, %v372
        %s374 = sadd.s32 %s243, 5
        %s375 = smul.u32 %s374, 128
        %s376 = sadd.s32 %s375, %s248
        %s377 = sld [smem:[#allocation6 + %s376]]
        %v378 = vmul.f32 %v361, %v373
        %v379 = vstv %s377
        %v380 = vsub.f32 %v379, %v378
        %v381 = vmul.f32 %v270, %v373
        %v382 = vmul.f32 %v271, %v373
        %v383 = vadd.f32 %v381, %v380
        %v384 = vadd.f32 %v382, %v380
        %v385 = vmax.f32 %v383, 0.0
        %v386 = vmax.f32 %v384, 0.0
        %387 = vst [vmem:[%s217] sm:$0xff] %v385
        %388 = vst [vmem:[%s217 + $0x8] sm:$0xff] %v386
        %v389 = vld [vmem:[%s294] sm:$0xff]
        %v390 = vld [vmem:[%s294 + $0x8] sm:$0xff]
        %v391 = vrot.slane %v389, 7
        %v392 = vrot.slane %v390, 7
        %v393 = vmul.f32 %v391, %v224
        %v394 = vmul.f32 %v392, %v224
        %v395 = vrot.slane %v389, 1
        %v396 = vrot.slane %v390, 1
        %v397 = vmul.f32 %v395, %v227
        %v398 = vmul.f32 %v396, %v227
        %s399 = sld [smem:[#allocation6 + %s305]]
        %v400 = vstv %s399
        %v401 = vmul.f32 %v400, %v393
        %v402 = vmul.f32 %v400, %v394
        %s403 = sld [smem:[#allocation6 + %s316]]
        %v404 = vstv %s403
        %v405 = vmul.f32 %v404, %v389
        %v406 = vmul.f32 %v404, %v390
        %v407 = vadd.f32 %v401, %v405
        %v408 = vadd.f32 %v402, %v406
        %s409 = sld [smem:[#allocation6 + %s325]]
        %v410 = vstv %s409
        %v411 = vmul.f32 %v410, %v397
        %v412 = vmul.f32 %v410, %v398
        %v413 = vadd.f32 %v407, %v411
        %v414 = vadd.f32 %v408, %v412
        %s415 = sld [smem:[#allocation6 + %s334]]
        %v416 = vstv %s415
        %v417 = vadd.f32 %v413, %v416
        %v418 = vadd.f32 %v414, %v416
        %s419 = sadd.s32 %s310, 4
        %s420 = smul.u32 %s419, 128
        %s421 = sadd.s32 %s420, %s315
        %s422 = sld [smem:[#allocation6 + %s421]]
        %v423 = vstv %s422
        %v424 = vmul.f32 %v367, %v423
        %s425 = sadd.s32 %s310, 5
        %s426 = smul.u32 %s425, 128
        %s427 = sadd.s32 %s426, %s315
        %s428 = sld [smem:[#allocation6 + %s427]]
        %v429 = vmul.f32 %v361, %v424
        %v430 = vstv %s428
        %v431 = vsub.f32 %v430, %v429
        %v432 = vmul.f32 %v417, %v424
        %v433 = vmul.f32 %v418, %v424
        %v434 = vadd.f32 %v432, %v431
        %v435 = vadd.f32 %v433, %v431
        %v436 = vmax.f32 %v434, 0.0
        %v437 = vmax.f32 %v435, 0.0
        %s438 = scalar_lea.vmem %s217, 64 [#allocation7]
        %439 = vst [vmem:[%s438] sm:$0xff] %v436
        %440 = vst [vmem:[%s438 + $0x8] sm:$0xff] %v437
        %s441 = scalar_lea.vmem %s192, 32 [#allocation2]
        %v442 = vld [vmem:[%s441] sm:$0xff]
        %v443 = vld [vmem:[%s441 + $0x8] sm:$0xff]
        %v444 = vrot.slane %v442, 7
        %v445 = vrot.slane %v443, 7
        %v446 = vmul.f32 %v444, %v224
        %v447 = vmul.f32 %v445, %v224
        %v448 = vrot.slane %v442, 1
        %v449 = vrot.slane %v443, 1
        %v450 = vmul.f32 %v448, %v227
        %v451 = vmul.f32 %v449, %v227
        %s452 = sadd.s32 %s238, 16
        %s453 = sld [smem:[#allocation6 + %s452]]
        %v454 = vstv %s453
        %v455 = vmul.f32 %v454, %v446
        %v456 = vmul.f32 %v454, %v447
        %s457 = sshra.s32 %s452, 7
        %s458 = sand.u32 %s452, 127
        %s459 = sadd.s32 %s457, 1
        %s460 = smul.u32 %s459, 128
        %s461 = sshra.s32 %s452, 7
        %s462 = sand.u32 %s452, 127
        %s463 = sadd.s32 %s460, %s462
        %s464 = sld [smem:[#allocation6 + %s463]]
        %v465 = vstv %s464
        %v466 = vmul.f32 %v465, %v442
        %v467 = vmul.f32 %v465, %v443
        %v468 = vadd.f32 %v455, %v466
        %v469 = vadd.f32 %v456, %v467
        %s470 = sadd.s32 %s457, 2
        %s471 = smul.u32 %s470, 128
        %s472 = sadd.s32 %s471, %s462
        %s473 = sld [smem:[#allocation6 + %s472]]
        %v474 = vstv %s473
        %v475 = vmul.f32 %v474, %v450
        %v476 = vmul.f32 %v474, %v451
        %v477 = vadd.f32 %v468, %v475
        %v478 = vadd.f32 %v469, %v476
        %s479 = sadd.s32 %s457, 3
        %s480 = smul.u32 %s479, 128
        %s481 = sadd.s32 %s480, %s462
        %s482 = sld [smem:[#allocation6 + %s481]]
        %v483 = vstv %s482
        %v484 = vadd.f32 %v477, %v483
        %v485 = vadd.f32 %v478, %v483
        %v486 = vadd.f32 %v484, %v485
        %487 = vadd.xlane.f32.xlu0 %v486
        %v488 = vpop.xlane.xlu0 %487
        %v489 = vrot.slane %v488, 4
        %v490 = vadd.f32 %v488, %v489
        %v491 = vrot.slane %v490, 2
        %v492 = vadd.f32 %v490, %v491
        %v493 = vrot.slane %v492, 1
        %v494 = vadd.f32 %v492, %v493
        %v495 = vadd.f32 %v494, 0.0
        %v496 = vmul.f32 %v484, %v484
        %v497 = vmul.f32 %v485, %v485
        %v498 = vadd.f32 %v496, %v497
        %499 = vadd.xlane.f32.xlu0 %v498
        %v500 = vpop.xlane.xlu0 %499
        %v501 = vrot.slane %v500, 4
        %v502 = vadd.f32 %v500, %v501
        %v503 = vrot.slane %v502, 2
        %v504 = vadd.f32 %v502, %v503
        %v505 = vrot.slane %v504, 1
        %v506 = vadd.f32 %v504, %v505
        %v507 = vadd.f32 %v506, 0.0
        %s508 = scalar_lea.vmem %s192, 48 [#allocation2]
        %v509 = vld [vmem:[%s508] sm:$0xff]
        %v510 = vld [vmem:[%s508 + $0x8] sm:$0xff]
        %v511 = vrot.slane %v509, 7
        %v512 = vrot.slane %v510, 7
        %v513 = vmul.f32 %v511, %v224
        %v514 = vmul.f32 %v512, %v224
        %v515 = vrot.slane %v509, 1
        %v516 = vrot.slane %v510, 1
        %v517 = vmul.f32 %v515, %v227
        %v518 = vmul.f32 %v516, %v227
        %s519 = sadd.s32 %s238, 17
        %s520 = sld [smem:[#allocation6 + %s519]]
        %v521 = vstv %s520
        %v522 = vmul.f32 %v521, %v513
        %v523 = vmul.f32 %v521, %v514
        %s524 = sshra.s32 %s519, 7
        %s525 = sand.u32 %s519, 127
        %s526 = sadd.s32 %s524, 1
        %s527 = smul.u32 %s526, 128
        %s528 = sshra.s32 %s519, 7
        %s529 = sand.u32 %s519, 127
        %s530 = sadd.s32 %s527, %s529
        %s531 = sld [smem:[#allocation6 + %s530]]
        %v532 = vstv %s531
        %v533 = vmul.f32 %v532, %v509
        %v534 = vmul.f32 %v532, %v510
        %v535 = vadd.f32 %v522, %v533
        %v536 = vadd.f32 %v523, %v534
        %s537 = sadd.s32 %s524, 2
        %s538 = smul.u32 %s537, 128
        %s539 = sadd.s32 %s538, %s529
        %s540 = sld [smem:[#allocation6 + %s539]]
        %v541 = vstv %s540
        %v542 = vmul.f32 %v541, %v517
        %v543 = vmul.f32 %v541, %v518
        %v544 = vadd.f32 %v535, %v542
        %v545 = vadd.f32 %v536, %v543
        %s546 = sadd.s32 %s524, 3
        %s547 = smul.u32 %s546, 128
        %s548 = sadd.s32 %s547, %s529
        %s549 = sld [smem:[#allocation6 + %s548]]
        %v550 = vstv %s549
        %v551 = vadd.f32 %v544, %v550
        %v552 = vadd.f32 %v545, %v550
        %v553 = vadd.f32 %v551, %v552
        %554 = vadd.xlane.f32.xlu0 %v553
        %v555 = vpop.xlane.xlu0 %554
        %v556 = vrot.slane %v555, 4
        %v557 = vadd.f32 %v555, %v556
        %v558 = vrot.slane %v557, 2
        %v559 = vadd.f32 %v557, %v558
        %v560 = vrot.slane %v559, 1
        %v561 = vadd.f32 %v559, %v560
        %v562 = vadd.f32 %v495, %v561
        %v563 = vmul.f32 %v551, %v551
        %v564 = vmul.f32 %v552, %v552
        %v565 = vadd.f32 %v563, %v564
        %566 = vadd.xlane.f32.xlu0 %v565
        %v567 = vpop.xlane.xlu0 %566
        %v568 = vrot.slane %v567, 4
        %v569 = vadd.f32 %v567, %v568
        %v570 = vrot.slane %v569, 2
        %v571 = vadd.f32 %v569, %v570
        %v572 = vrot.slane %v571, 1
        %v573 = vadd.f32 %v571, %v572
        %v574 = vadd.f32 %v507, %v573
        %v575 = vmul.f32 %v562, 0.00024414063
        %v576 = vmul.f32 %v574, 0.00024414063
        %v577 = vmul.f32 %v575, %v575
        %v578 = vsub.f32 %v576, %v577
        %v579 = vmax.f32 %v578, 0.0
        %v580 = vadd.f32 %v579, 1e-05
        %v581 = vrsqrt.pop %v580
        %s582 = sadd.s32 %s457, 4
        %s583 = smul.u32 %s582, 128
        %s584 = sadd.s32 %s583, %s462
        %s585 = sld [smem:[#allocation6 + %s584]]
        %v586 = vstv %s585
        %v587 = vmul.f32 %v581, %v586
        %s588 = sadd.s32 %s457, 5
        %s589 = smul.u32 %s588, 128
        %s590 = sadd.s32 %s589, %s462
        %s591 = sld [smem:[#allocation6 + %s590]]
        %v592 = vmul.f32 %v575, %v587
        %v593 = vstv %s591
        %v594 = vsub.f32 %v593, %v592
        %v595 = vmul.f32 %v484, %v587
        %v596 = vmul.f32 %v485, %v587
        %v597 = vadd.f32 %v595, %v594
        %v598 = vadd.f32 %v596, %v594
        %v599 = vmax.f32 %v597, 0.0
        %v600 = vmax.f32 %v598, 0.0
        %s601 = scalar_lea.vmem %s217, 16 [#allocation7]
        %602 = vst [vmem:[%s601] sm:$0xff] %v599
        %603 = vst [vmem:[%s601 + $0x8] sm:$0xff] %v600
        %v604 = vld [vmem:[%s508] sm:$0xff]
        %v605 = vld [vmem:[%s508 + $0x8] sm:$0xff]
        %v606 = vrot.slane %v604, 7
        %v607 = vrot.slane %v605, 7
        %v608 = vmul.f32 %v606, %v224
        %v609 = vmul.f32 %v607, %v224
        %v610 = vrot.slane %v604, 1
        %v611 = vrot.slane %v605, 1
        %v612 = vmul.f32 %v610, %v227
        %v613 = vmul.f32 %v611, %v227
        %s614 = sld [smem:[#allocation6 + %s519]]
        %v615 = vstv %s614
        %v616 = vmul.f32 %v615, %v608
        %v617 = vmul.f32 %v615, %v609
        %s618 = sld [smem:[#allocation6 + %s530]]
        %v619 = vstv %s618
        %v620 = vmul.f32 %v619, %v604
        %v621 = vmul.f32 %v619, %v605
        %v622 = vadd.f32 %v616, %v620
        %v623 = vadd.f32 %v617, %v621
        %s624 = sld [smem:[#allocation6 + %s539]]
        %v625 = vstv %s624
        %v626 = vmul.f32 %v625, %v612
        %v627 = vmul.f32 %v625, %v613
        %v628 = vadd.f32 %v622, %v626
        %v629 = vadd.f32 %v623, %v627
        %s630 = sld [smem:[#allocation6 + %s548]]
        %v631 = vstv %s630
        %v632 = vadd.f32 %v628, %v631
        %v633 = vadd.f32 %v629, %v631
        %s634 = sadd.s32 %s524, 4
        %s635 = smul.u32 %s634, 128
        %s636 = sadd.s32 %s635, %s529
        %s637 = sld [smem:[#allocation6 + %s636]]
        %v638 = vstv %s637
        %v639 = vmul.f32 %v581, %v638
        %s640 = sadd.s32 %s524, 5
        %s641 = smul.u32 %s640, 128
        %s642 = sadd.s32 %s641, %s529
        %s643 = sld [smem:[#allocation6 + %s642]]
        %v644 = vmul.f32 %v575, %v639
        %v645 = vstv %s643
        %v646 = vsub.f32 %v645, %v644
        %v647 = vmul.f32 %v632, %v639
        %v648 = vmul.f32 %v633, %v639
        %v649 = vadd.f32 %v647, %v646
        %v650 = vadd.f32 %v648, %v646
        %v651 = vmax.f32 %v649, 0.0
        %v652 = vmax.f32 %v650, 0.0
        %s653 = scalar_lea.vmem %s217, 80 [#allocation7]
        %654 = vst [vmem:[%s653] sm:$0xff] %v651
        %655 = vst [vmem:[%s653 + $0x8] sm:$0xff] %v652
        %s656 = scalar_lea.vmem %s192, 64 [#allocation2]
        %v657 = vld [vmem:[%s656] sm:$0xff]
        %v658 = vld [vmem:[%s656 + $0x8] sm:$0xff]
        %v659 = vrot.slane %v657, 7
        %v660 = vrot.slane %v658, 7
        %v661 = vmul.f32 %v659, %v224
        %v662 = vmul.f32 %v660, %v224
        %v663 = vrot.slane %v657, 1
        %v664 = vrot.slane %v658, 1
        %v665 = vmul.f32 %v663, %v227
        %v666 = vmul.f32 %v664, %v227
        %s667 = sadd.s32 %s238, 32
        %s668 = sld [smem:[#allocation6 + %s667]]
        %v669 = vstv %s668
        %v670 = vmul.f32 %v669, %v661
        %v671 = vmul.f32 %v669, %v662
        %s672 = sshra.s32 %s667, 7
        %s673 = sand.u32 %s667, 127
        %s674 = sadd.s32 %s672, 1
        %s675 = smul.u32 %s674, 128
        %s676 = sshra.s32 %s667, 7
        %s677 = sand.u32 %s667, 127
        %s678 = sadd.s32 %s675, %s677
        %s679 = sld [smem:[#allocation6 + %s678]]
        %v680 = vstv %s679
        %v681 = vmul.f32 %v680, %v657
        %v682 = vmul.f32 %v680, %v658
        %v683 = vadd.f32 %v670, %v681
        %v684 = vadd.f32 %v671, %v682
        %s685 = sadd.s32 %s672, 2
        %s686 = smul.u32 %s685, 128
        %s687 = sadd.s32 %s686, %s677
        %s688 = sld [smem:[#allocation6 + %s687]]
        %v689 = vstv %s688
        %v690 = vmul.f32 %v689, %v665
        %v691 = vmul.f32 %v689, %v666
        %v692 = vadd.f32 %v683, %v690
        %v693 = vadd.f32 %v684, %v691
        %s694 = sadd.s32 %s672, 3
        %s695 = smul.u32 %s694, 128
        %s696 = sadd.s32 %s695, %s677
        %s697 = sld [smem:[#allocation6 + %s696]]
        %v698 = vstv %s697
        %v699 = vadd.f32 %v692, %v698
        %v700 = vadd.f32 %v693, %v698
        %v701 = vadd.f32 %v699, %v700
        %702 = vadd.xlane.f32.xlu0 %v701
        %v703 = vpop.xlane.xlu0 %702
        %v704 = vrot.slane %v703, 4
        %v705 = vadd.f32 %v703, %v704
        %v706 = vrot.slane %v705, 2
        %v707 = vadd.f32 %v705, %v706
        %v708 = vrot.slane %v707, 1
        %v709 = vadd.f32 %v707, %v708
        %v710 = vadd.f32 %v709, 0.0
        %v711 = vmul.f32 %v699, %v699
        %v712 = vmul.f32 %v700, %v700
        %v713 = vadd.f32 %v711, %v712
        %714 = vadd.xlane.f32.xlu0 %v713
        %v715 = vpop.xlane.xlu0 %714
        %v716 = vrot.slane %v715, 4
        %v717 = vadd.f32 %v715, %v716
        %v718 = vrot.slane %v717, 2
        %v719 = vadd.f32 %v717, %v718
        %v720 = vrot.slane %v719, 1
        %v721 = vadd.f32 %v719, %v720
        %v722 = vadd.f32 %v721, 0.0
        %s723 = scalar_lea.vmem %s192, 80 [#allocation2]
        %v724 = vld [vmem:[%s723] sm:$0xff]
        %v725 = vld [vmem:[%s723 + $0x8] sm:$0xff]
        %v726 = vrot.slane %v724, 7
        %v727 = vrot.slane %v725, 7
        %v728 = vmul.f32 %v726, %v224
        %v729 = vmul.f32 %v727, %v224
        %v730 = vrot.slane %v724, 1
        %v731 = vrot.slane %v725, 1
        %v732 = vmul.f32 %v730, %v227
        %v733 = vmul.f32 %v731, %v227
        %s734 = sadd.s32 %s238, 33
        %s735 = sld [smem:[#allocation6 + %s734]]
        %v736 = vstv %s735
        %v737 = vmul.f32 %v736, %v728
        %v738 = vmul.f32 %v736, %v729
        %s739 = sshra.s32 %s734, 7
        %s740 = sand.u32 %s734, 127
        %s741 = sadd.s32 %s739, 1
        %s742 = smul.u32 %s741, 128
        %s743 = sshra.s32 %s734, 7
        %s744 = sand.u32 %s734, 127
        %s745 = sadd.s32 %s742, %s744
        %s746 = sld [smem:[#allocation6 + %s745]]
        %v747 = vstv %s746
        %v748 = vmul.f32 %v747, %v724
        %v749 = vmul.f32 %v747, %v725
        %v750 = vadd.f32 %v737, %v748
        %v751 = vadd.f32 %v738, %v749
        %s752 = sadd.s32 %s739, 2
        %s753 = smul.u32 %s752, 128
        %s754 = sadd.s32 %s753, %s744
        %s755 = sld [smem:[#allocation6 + %s754]]
        %v756 = vstv %s755
        %v757 = vmul.f32 %v756, %v732
        %v758 = vmul.f32 %v756, %v733
        %v759 = vadd.f32 %v750, %v757
        %v760 = vadd.f32 %v751, %v758
        %s761 = sadd.s32 %s739, 3
        %s762 = smul.u32 %s761, 128
        %s763 = sadd.s32 %s762, %s744
        %s764 = sld [smem:[#allocation6 + %s763]]
        %v765 = vstv %s764
        %v766 = vadd.f32 %v759, %v765
        %v767 = vadd.f32 %v760, %v765
        %v768 = vadd.f32 %v766, %v767
        %769 = vadd.xlane.f32.xlu0 %v768
        %v770 = vpop.xlane.xlu0 %769
        %v771 = vrot.slane %v770, 4
        %v772 = vadd.f32 %v770, %v771
        %v773 = vrot.slane %v772, 2
        %v774 = vadd.f32 %v772, %v773
        %v775 = vrot.slane %v774, 1
        %v776 = vadd.f32 %v774, %v775
        %v777 = vadd.f32 %v710, %v776
        %v778 = vmul.f32 %v766, %v766
        %v779 = vmul.f32 %v767, %v767
        %v780 = vadd.f32 %v778, %v779
        %781 = vadd.xlane.f32.xlu0 %v780
        %v782 = vpop.xlane.xlu0 %781
        %v783 = vrot.slane %v782, 4
        %v784 = vadd.f32 %v782, %v783
        %v785 = vrot.slane %v784, 2
        %v786 = vadd.f32 %v784, %v785
        %v787 = vrot.slane %v786, 1
        %v788 = vadd.f32 %v786, %v787
        %v789 = vadd.f32 %v722, %v788
        %v790 = vmul.f32 %v777, 0.00024414063
        %v791 = vmul.f32 %v789, 0.00024414063
        %v792 = vmul.f32 %v790, %v790
        %v793 = vsub.f32 %v791, %v792
        %v794 = vmax.f32 %v793, 0.0
        %v795 = vadd.f32 %v794, 1e-05
        %v796 = vrsqrt.pop %v795
        %s797 = sadd.s32 %s672, 4
        %s798 = smul.u32 %s797, 128
        %s799 = sadd.s32 %s798, %s677
        %s800 = sld [smem:[#allocation6 + %s799]]
        %v801 = vstv %s800
        %v802 = vmul.f32 %v796, %v801
        %s803 = sadd.s32 %s672, 5
        %s804 = smul.u32 %s803, 128
        %s805 = sadd.s32 %s804, %s677
        %s806 = sld [smem:[#allocation6 + %s805]]
        %v807 = vmul.f32 %v790, %v802
        %v808 = vstv %s806
        %v809 = vsub.f32 %v808, %v807
        %v810 = vmul.f32 %v699, %v802
        %v811 = vmul.f32 %v700, %v802
        %v812 = vadd.f32 %v810, %v809
        %v813 = vadd.f32 %v811, %v809
        %v814 = vmax.f32 %v812, 0.0
        %v815 = vmax.f32 %v813, 0.0
        %s816 = scalar_lea.vmem %s217, 32 [#allocation7]
        %817 = vst [vmem:[%s816] sm:$0xff] %v814
        %818 = vst [vmem:[%s816 + $0x8] sm:$0xff] %v815
        %v819 = vld [vmem:[%s723] sm:$0xff]
        %v820 = vld [vmem:[%s723 + $0x8] sm:$0xff]
        %v821 = vrot.slane %v819, 7
        %v822 = vrot.slane %v820, 7
        %v823 = vmul.f32 %v821, %v224
        %v824 = vmul.f32 %v822, %v224
        %v825 = vrot.slane %v819, 1
        %v826 = vrot.slane %v820, 1
        %v827 = vmul.f32 %v825, %v227
        %v828 = vmul.f32 %v826, %v227
        %s829 = sld [smem:[#allocation6 + %s734]]
        %v830 = vstv %s829
        %v831 = vmul.f32 %v830, %v823
        %v832 = vmul.f32 %v830, %v824
        %s833 = sld [smem:[#allocation6 + %s745]]
        %v834 = vstv %s833
        %v835 = vmul.f32 %v834, %v819
        %v836 = vmul.f32 %v834, %v820
        %v837 = vadd.f32 %v831, %v835
        %v838 = vadd.f32 %v832, %v836
        %s839 = sld [smem:[#allocation6 + %s754]]
        %v840 = vstv %s839
        %v841 = vmul.f32 %v840, %v827
        %v842 = vmul.f32 %v840, %v828
        %v843 = vadd.f32 %v837, %v841
        %v844 = vadd.f32 %v838, %v842
        %s845 = sld [smem:[#allocation6 + %s763]]
        %v846 = vstv %s845
        %v847 = vadd.f32 %v843, %v846
        %v848 = vadd.f32 %v844, %v846
        %s849 = sadd.s32 %s739, 4
        %s850 = smul.u32 %s849, 128
        %s851 = sadd.s32 %s850, %s744
        %s852 = sld [smem:[#allocation6 + %s851]]
        %v853 = vstv %s852
        %v854 = vmul.f32 %v796, %v853
        %s855 = sadd.s32 %s739, 5
        %s856 = smul.u32 %s855, 128
        %s857 = sadd.s32 %s856, %s744
        %s858 = sld [smem:[#allocation6 + %s857]]
        %v859 = vmul.f32 %v790, %v854
        %v860 = vstv %s858
        %v861 = vsub.f32 %v860, %v859
        %v862 = vmul.f32 %v847, %v854
        %v863 = vmul.f32 %v848, %v854
        %v864 = vadd.f32 %v862, %v861
        %v865 = vadd.f32 %v863, %v861
        %v866 = vmax.f32 %v864, 0.0
        %v867 = vmax.f32 %v865, 0.0
        %s868 = scalar_lea.vmem %s217, 96 [#allocation7]
        %869 = vst [vmem:[%s868] sm:$0xff] %v866
        %870 = vst [vmem:[%s868 + $0x8] sm:$0xff] %v867
        %s871 = scalar_lea.vmem %s192, 96 [#allocation2]
        %v872 = vld [vmem:[%s871] sm:$0xff]
        %v873 = vld [vmem:[%s871 + $0x8] sm:$0xff]
        %v874 = vrot.slane %v872, 7
        %v875 = vrot.slane %v873, 7
        %v876 = vmul.f32 %v874, %v224
        %v877 = vmul.f32 %v875, %v224
        %v878 = vrot.slane %v872, 1
        %v879 = vrot.slane %v873, 1
        %v880 = vmul.f32 %v878, %v227
        %v881 = vmul.f32 %v879, %v227
        %s882 = sadd.s32 %s238, 48
        %s883 = sld [smem:[#allocation6 + %s882]]
        %v884 = vstv %s883
        %v885 = vmul.f32 %v884, %v876
        %v886 = vmul.f32 %v884, %v877
        %s887 = sshra.s32 %s882, 7
        %s888 = sand.u32 %s882, 127
        %s889 = sadd.s32 %s887, 1
        %s890 = smul.u32 %s889, 128
        %s891 = sshra.s32 %s882, 7
        %s892 = sand.u32 %s882, 127
        %s893 = sadd.s32 %s890, %s892
        %s894 = sld [smem:[#allocation6 + %s893]]
        %v895 = vstv %s894
        %v896 = vmul.f32 %v895, %v872
        %v897 = vmul.f32 %v895, %v873
        %v898 = vadd.f32 %v885, %v896
        %v899 = vadd.f32 %v886, %v897
        %s900 = sadd.s32 %s887, 2
        %s901 = smul.u32 %s900, 128
        %s902 = sadd.s32 %s901, %s892
        %s903 = sld [smem:[#allocation6 + %s902]]
        %v904 = vstv %s903
        %v905 = vmul.f32 %v904, %v880
        %v906 = vmul.f32 %v904, %v881
        %v907 = vadd.f32 %v898, %v905
        %v908 = vadd.f32 %v899, %v906
        %s909 = sadd.s32 %s887, 3
        %s910 = smul.u32 %s909, 128
        %s911 = sadd.s32 %s910, %s892
        %s912 = sld [smem:[#allocation6 + %s911]]
        %v913 = vstv %s912
        %v914 = vadd.f32 %v907, %v913
        %v915 = vadd.f32 %v908, %v913
        %v916 = vadd.f32 %v914, %v915
        %917 = vadd.xlane.f32.xlu0 %v916
        %v918 = vpop.xlane.xlu0 %917
        %v919 = vrot.slane %v918, 4
        %v920 = vadd.f32 %v918, %v919
        %v921 = vrot.slane %v920, 2
        %v922 = vadd.f32 %v920, %v921
        %v923 = vrot.slane %v922, 1
        %v924 = vadd.f32 %v922, %v923
        %v925 = vadd.f32 %v924, 0.0
        %v926 = vmul.f32 %v914, %v914
        %v927 = vmul.f32 %v915, %v915
        %v928 = vadd.f32 %v926, %v927
        %929 = vadd.xlane.f32.xlu0 %v928
        %v930 = vpop.xlane.xlu0 %929
        %v931 = vrot.slane %v930, 4
        %v932 = vadd.f32 %v930, %v931
        %v933 = vrot.slane %v932, 2
        %v934 = vadd.f32 %v932, %v933
        %v935 = vrot.slane %v934, 1
        %v936 = vadd.f32 %v934, %v935
        %v937 = vadd.f32 %v936, 0.0
        %s938 = scalar_lea.vmem %s192, 112 [#allocation2]
        %v939 = vld [vmem:[%s938] sm:$0xff]
        %v940 = vld [vmem:[%s938 + $0x8] sm:$0xff]
        %v941 = vrot.slane %v939, 7
        %v942 = vrot.slane %v940, 7
        %v943 = vmul.f32 %v941, %v224
        %v944 = vmul.f32 %v942, %v224
        %v945 = vrot.slane %v939, 1
        %v946 = vrot.slane %v940, 1
        %v947 = vmul.f32 %v945, %v227
        %v948 = vmul.f32 %v946, %v227
        %s949 = sadd.s32 %s238, 49
        %s950 = sld [smem:[#allocation6 + %s949]]
        %v951 = vstv %s950
        %v952 = vmul.f32 %v951, %v943
        %v953 = vmul.f32 %v951, %v944
        %s954 = sshra.s32 %s949, 7
        %s955 = sand.u32 %s949, 127
        %s956 = sadd.s32 %s954, 1
        %s957 = smul.u32 %s956, 128
        %s958 = sshra.s32 %s949, 7
        %s959 = sand.u32 %s949, 127
        %s960 = sadd.s32 %s957, %s959
        %s961 = sld [smem:[#allocation6 + %s960]]
        %v962 = vstv %s961
        %v963 = vmul.f32 %v962, %v939
        %v964 = vmul.f32 %v962, %v940
        %v965 = vadd.f32 %v952, %v963
        %v966 = vadd.f32 %v953, %v964
        %s967 = sadd.s32 %s954, 2
        %s968 = smul.u32 %s967, 128
        %s969 = sadd.s32 %s968, %s959
        %s970 = sld [smem:[#allocation6 + %s969]]
        %v971 = vstv %s970
        %v972 = vmul.f32 %v971, %v947
        %v973 = vmul.f32 %v971, %v948
        %v974 = vadd.f32 %v965, %v972
        %v975 = vadd.f32 %v966, %v973
        %s976 = sadd.s32 %s954, 3
        %s977 = smul.u32 %s976, 128
        %s978 = sadd.s32 %s977, %s959
        %s979 = sld [smem:[#allocation6 + %s978]]
        %v980 = vstv %s979
        %v981 = vadd.f32 %v974, %v980
        %v982 = vadd.f32 %v975, %v980
        %v983 = vadd.f32 %v981, %v982
        %984 = vadd.xlane.f32.xlu0 %v983
        %v985 = vpop.xlane.xlu0 %984
        %v986 = vrot.slane %v985, 4
        %v987 = vadd.f32 %v985, %v986
        %v988 = vrot.slane %v987, 2
        %v989 = vadd.f32 %v987, %v988
        %v990 = vrot.slane %v989, 1
        %v991 = vadd.f32 %v989, %v990
        %v992 = vadd.f32 %v925, %v991
        %v993 = vmul.f32 %v981, %v981
        %v994 = vmul.f32 %v982, %v982
        %v995 = vadd.f32 %v993, %v994
        %996 = vadd.xlane.f32.xlu0 %v995
        %v997 = vpop.xlane.xlu0 %996
        %v998 = vrot.slane %v997, 4
        %v999 = vadd.f32 %v997, %v998
        %v1000 = vrot.slane %v999, 2
        %v1001 = vadd.f32 %v999, %v1000
        %v1002 = vrot.slane %v1001, 1
        %v1003 = vadd.f32 %v1001, %v1002
        %v1004 = vadd.f32 %v937, %v1003
        %v1005 = vmul.f32 %v992, 0.00024414063
        %v1006 = vmul.f32 %v1004, 0.00024414063
        %v1007 = vmul.f32 %v1005, %v1005
        %v1008 = vsub.f32 %v1006, %v1007
        %v1009 = vmax.f32 %v1008, 0.0
        %v1010 = vadd.f32 %v1009, 1e-05
        %v1011 = vrsqrt.pop %v1010
        %s1012 = sadd.s32 %s887, 4
        %s1013 = smul.u32 %s1012, 128
        %s1014 = sadd.s32 %s1013, %s892
        %s1015 = sld [smem:[#allocation6 + %s1014]]
        %v1016 = vstv %s1015
        %v1017 = vmul.f32 %v1011, %v1016
        %s1018 = sadd.s32 %s887, 5
        %s1019 = smul.u32 %s1018, 128
        %s1020 = sadd.s32 %s1019, %s892
        %s1021 = sld [smem:[#allocation6 + %s1020]]
        %v1022 = vmul.f32 %v1005, %v1017
        %v1023 = vstv %s1021
        %v1024 = vsub.f32 %v1023, %v1022
        %v1025 = vmul.f32 %v914, %v1017
        %v1026 = vmul.f32 %v915, %v1017
        %v1027 = vadd.f32 %v1025, %v1024
        %v1028 = vadd.f32 %v1026, %v1024
        %v1029 = vmax.f32 %v1027, 0.0
        %v1030 = vmax.f32 %v1028, 0.0
        %s1031 = scalar_lea.vmem %s217, 48 [#allocation7]
        %1032 = vst [vmem:[%s1031] sm:$0xff] %v1029
        %1033 = vst [vmem:[%s1031 + $0x8] sm:$0xff] %v1030
        %v1034 = vld [vmem:[%s938] sm:$0xff]
        %v1035 = vld [vmem:[%s938 + $0x8] sm:$0xff]
        %v1036 = vrot.slane %v1034, 7
        %v1037 = vrot.slane %v1035, 7
        %v1038 = vmul.f32 %v1036, %v224
        %v1039 = vmul.f32 %v1037, %v224
        %v1040 = vrot.slane %v1034, 1
        %v1041 = vrot.slane %v1035, 1
        %v1042 = vmul.f32 %v1040, %v227
        %v1043 = vmul.f32 %v1041, %v227
        %s1044 = sld [smem:[#allocation6 + %s949]]
        %v1045 = vstv %s1044
        %v1046 = vmul.f32 %v1045, %v1038
        %v1047 = vmul.f32 %v1045, %v1039
        %s1048 = sld [smem:[#allocation6 + %s960]]
        %v1049 = vstv %s1048
        %v1050 = vmul.f32 %v1049, %v1034
        %v1051 = vmul.f32 %v1049, %v1035
        %v1052 = vadd.f32 %v1046, %v1050
        %v1053 = vadd.f32 %v1047, %v1051
        %s1054 = sld [smem:[#allocation6 + %s969]]
        %v1055 = vstv %s1054
        %v1056 = vmul.f32 %v1055, %v1042
        %v1057 = vmul.f32 %v1055, %v1043
        %v1058 = vadd.f32 %v1052, %v1056
        %v1059 = vadd.f32 %v1053, %v1057
        %s1060 = sld [smem:[#allocation6 + %s978]]
        %v1061 = vstv %s1060
        %v1062 = vadd.f32 %v1058, %v1061
        %v1063 = vadd.f32 %v1059, %v1061
        %s1064 = sadd.s32 %s954, 4
        %s1065 = smul.u32 %s1064, 128
        %s1066 = sadd.s32 %s1065, %s959
        %s1067 = sld [smem:[#allocation6 + %s1066]]
        %v1068 = vstv %s1067
        %v1069 = vmul.f32 %v1011, %v1068
        %s1070 = sadd.s32 %s954, 5
        %s1071 = smul.u32 %s1070, 128
        %s1072 = sadd.s32 %s1071, %s959
        %s1073 = sld [smem:[#allocation6 + %s1072]]
        %v1074 = vmul.f32 %v1005, %v1069
        %v1075 = vstv %s1073
        %v1076 = vsub.f32 %v1075, %v1074
        %v1077 = vmul.f32 %v1062, %v1069
        %v1078 = vmul.f32 %v1063, %v1069
        %v1079 = vadd.f32 %v1077, %v1076
        %v1080 = vadd.f32 %v1078, %v1076
        %v1081 = vmax.f32 %v1079, 0.0
        %v1082 = vmax.f32 %v1080, 0.0
        %s1083 = scalar_lea.vmem %s217, 112 [#allocation7]
        %1084 = vst [vmem:[%s1083] sm:$0xff] %v1081
        %1085 = vst [vmem:[%s1083 + $0x8] sm:$0xff] %v1082
        %s1086 = sand.u32 %s91, 1
        %s1087 = scalar_lea.sflag [#allocation4], %s1086
        %s1088 = sand.u32 %s91, 1
        %s1089 = smul.addr %s1088, 128
        %s1090 = scalar_lea.vmem [#allocation7], %s1089
        // Predicated region
        $region37: #{tpu_custom_call.1} parent=27 // pred_check
          %p1091 = pneg %p101
        $region38: #{tpu_custom_call.1} parent=27 // pred_check_branch
          %1093 = sbr.rel (%p1091) target = $region40
        $region39: #{tpu_custom_call.1} parent=27 // pred_region
          %s1094 = smul.u32 8, %s25
          %s1096 = ssub.s32 2048, 2048
          %1097 = vsyncadd %s1087, %s1096
          %s1098 = smul.addr %s1094, 2
          %s1099 = smul.addr %s24, 128
          %s1100 = sadd.s32 %s1098, %s1099
          %s1101 = smul.addr %s1100, 128
          %s1102 = scalar_lea.hbm %s2, %s1101
          %s1103 = sshll.u32 %s1090, 4
          %s1104 = int_to_ptr.vmem [resolvable:$true] %s1103
          %1109 = dma.vmem_to_hbm [thread:$0]  %s1104, 2048, %s1102, %s1087, 256, 256, 16
        $region40: #{tpu_custom_call.1} parent=27 // pred_fallthru
          _
      $region28: #{tpu_custom_call.1} parent=5 // pred_fallthru
        _
      %p1110 = scmp.le.s32.totalorder 2, %s15
      // Predicated region
      $region41: #{tpu_custom_call.1} parent=5 // pred_check
        %p1111 = pneg %p1110
      $region42: #{tpu_custom_call.1} parent=5 // pred_check_branch
        %1113 = sbr.rel (%p1111) target = $region44
      $region43: #{tpu_custom_call.1} parent=5 // pred_region
        %s1114 = ssub.s32 %s15, 2
        // Predicated region
        $region45: #{tpu_custom_call.1} parent=43 // pred_check
          %p1115 = pneg %p107
        $region46: #{tpu_custom_call.1} parent=43 // pred_check_branch
          %1117 = sbr.rel (%p1115) target = $region48
        $region47: #{tpu_custom_call.1} parent=43 // pred_region
          %s1118 = sand.u32 %s92, 1
          %s1119 = scalar_lea.sflag [#allocation4], %s1118
          %s1120 = sand.u32 %s92, 1
          %s1121 = smul.addr %s1120, 128
          %s1122 = scalar_lea.vmem [#allocation7], %s1121
          %1123 = dma.done %s1119, 2048
        $region48: #{tpu_custom_call.1} parent=43 // pred_fallthru
          _
      $region44: #{tpu_custom_call.1} parent=5 // pred_fallthru
        _
    $region6: #{tpu_custom_call.1} parent=1 // loop_footer
      %s19 = sadd.s32 1, %s15
    $region7: #{tpu_custom_call.1} parent=1 // loop_footer_branch
      %14 = sbr.rel target = $region3
    $region8: #{tpu_custom_call.1} parent=1 // loop_exit
      _
    %1124 = vsyncpa [#allocation3], 1
    %s1125 = scalar_lea.sflag [#allocation3], 1
    %1126 = vsyncpa %s1125, 1
    %1127 = vsyncpa [#allocation4], 1
    %s1128 = scalar_lea.sflag [#allocation4], 1
    %1129 = vsyncpa %s1128, 1
    %1130 = vsyncpa [#allocation5], 1
    %s1131 = scalar_lea.sflag [#allocation5], 1
    %1132 = vsyncpa %s1131, 1

</llo_original>
